<compile_context>
chip_gen: v5e
topology: v5e:2x2
jax: 0.10.0
libtpu: 0.0.40
codegen_flags: <defaults>
</compile_context>

<pallas_src>
import functools

import jax
import jax.numpy as jnp
from jax.experimental import pallas as pl
from jax.experimental.pallas import tpu as pltpu


# ------------------------------ Pallas kernel -------------------------------

def _sepconv_kernel(*refs, kh, kw, dilation, ho, wo, has_bias):
    if has_bias:
        x_ref, dw_ref, dwb_ref, pw_ref, pwb_ref, o_ref, acc_ref = refs
    else:
        x_ref, dw_ref, pw_ref, o_ref, acc_ref = refs
        dwb_ref = pwb_ref = None

    # ---- depthwise KxK conv (VPU), stride 1, computed ONCE per batch element.
    # The result persists in acc_ref (VMEM scratch) across Cout tiles, which
    # requires the Cout grid axis (axis 1) to be the innermost, sequential
    # ("arbitrary") axis.  Do not reorder the grid or mark it parallel.
    @pl.when(pl.program_id(1) == 0)
    def _depthwise():
        x = x_ref[0]                         # (Hp, Wp, Cin), channels on lanes
        taps_w = dw_ref[...]                 # (kh*kw, 1, Cin), f32
        acc = None                           # f32 accumulation on the VPU
        for idh in range(kh):
            for idw in range(kw):
                h0 = idh * dilation
                w0 = idw * dilation
                tap = x[h0:h0 + ho, w0:w0 + wo, :]
                contrib = tap * taps_w[idh * kw + idw]
                acc = contrib if acc is None else acc + contrib
        if has_bias:
            acc = acc + dwb_ref[...]
        # Single cast to the scratch dtype (bf16 on the default MXU path).
        acc_ref[...] = acc.reshape(ho * wo, -1).astype(acc_ref.dtype)

    # ---- pointwise 1x1 conv (MXU) over this lane-dense Cout tile ----
    # acc_ref and pw_ref are already in the MXU input dtype (bf16 by default);
    # no per-step casts here.
    y = jnp.dot(acc_ref[...], pw_ref[...], preferred_element_type=jnp.float32)
    if has_bias:
        y = y + pwb_ref[...]
    o_ref[0] = y.astype(o_ref.dtype)


# ------------------------------- wrapper -------------------------------------

def _round_up(x, mult):
    return (x + mult - 1) // mult * mult


def _cout_tile(coutp):
    # coutp is already a multiple of 128; pick the widest lane-dense tile.
    for t in (512, 256, 128):
        if coutp % t == 0:
            return t
    return coutp  # unreachable (coutp % 128 == 0)


@functools.partial(
    jax.jit, static_argnames=("stride", "padding", "dilation", "mxu_bf16"))
def separable_conv2d(x_nchw, dw_w, pw_w, dw_b=None, pw_b=None, *,
                     stride=1, padding=0, dilation=1, mxu_bf16=True):
    """PyTorch SeparableConv2d.forward.

    x_nchw: (N, Cin, H, W)
    dw_w:   (Cin, 1, kh, kw)   torch depthwise weight (groups=Cin)
    pw_w:   (Cout, Cin, 1, 1)  torch pointwise weight
    dw_b / pw_b: optional (Cin,) / (Cout,) biases (module's bias=True case)
    returns (N, Cout, Ho, Wo) float32
    """
    n, cin, h, w = x_nchw.shape
    cout = pw_w.shape[0]
    kh, kw = int(dw_w.shape[2]), int(dw_w.shape[3])
    hp, wp = h + 2 * padding, w + 2 * padding
    # Dense (stride-1) output dims computed in the kernel; stride>1 is applied
    # by decimating afterwards (exact: the 1x1 pointwise commutes with it).
    ho1 = hp - dilation * (kh - 1)
    wo1 = wp - dilation * (kw - 1)
    m = ho1 * wo1
    has_bias = dw_b is not None

    pw_dtype = jnp.bfloat16 if mxu_bf16 else jnp.float32
    acc_dtype = jnp.bfloat16 if mxu_bf16 else jnp.float32

    # NCHW -> NHWC once: channels land on the 128-lane axis.
    x = jnp.transpose(x_nchw.astype(jnp.float32), (0, 2, 3, 1))
    if padding:
        # TODO(synk): fold this into the kernel via a VMEM halo to drop one
        # wrapper-side HBM pass over x.
        x = jnp.pad(x, ((0, 0), (padding, padding), (padding, padding), (0, 0)))

    # Weight re-layouts (done once inside the jit, tiny).
    dw_taps = jnp.transpose(dw_w.astype(jnp.float32),
                            (2, 3, 1, 0)).reshape(kh * kw, 1, cin)

    # Pointwise weights: pad Cout to a multiple of 128 (lane-dense tiles) and
    # cast to the MXU input dtype once, in HBM.
    coutp = _round_up(cout, 128)
    pw_mat = jnp.transpose(pw_w.astype(jnp.float32).reshape(cout, cin), (1, 0))
    if coutp != cout:
        pw_mat = jnp.pad(pw_mat, ((0, 0), (0, coutp - cout)))
    pw_mat = pw_mat.astype(pw_dtype)

    tcout = _cout_tile(coutp)
    n_ct = coutp // tcout

    in_specs = [
        # whole padded image for one batch element (last two dims = full dims)
        pl.BlockSpec((1, hp, wp, cin), lambda b, j: (b, 0, 0, 0)),
        pl.BlockSpec((kh * kw, 1, cin), lambda b, j: (0, 0, 0)),
    ]
    args = [x, dw_taps]
    if has_bias:
        in_specs.append(pl.BlockSpec((1, cin), lambda b, j: (0, 0)))
        args.append(dw_b.astype(jnp.float32).reshape(1, cin))
    in_specs.append(pl.BlockSpec((cin, tcout), lambda b, j: (0, j)))
    args.append(pw_mat)
    if has_bias:
        pwb = pw_b.astype(jnp.float32).reshape(1, cout)
        if coutp != cout:
            pwb = jnp.pad(pwb, ((0, 0), (0, coutp - cout)))
        in_specs.append(pl.BlockSpec((1, tcout), lambda b, j: (0, j)))
        args.append(pwb)

    # Explicit VMEM budget derived from the actual per-step footprint
    # (x tile + taps double-buffered, persistent acc scratch, streamed pw tile
    # and out tile double-buffered), clamped to be safe on v7x (64 MiB VMEM).
    bpe_acc = 2 if mxu_bf16 else 4
    bpe_pw = 2 if mxu_bf16 else 4
    est_vmem = (2 * hp * wp * cin * 4
                + 2 * kh * kw * cin * 4
                + m * cin * bpe_acc
                + 2 * cin * tcout * bpe_pw
                + 2 * m * tcout * 4
                + 4 * coutp * 4)
    vmem_limit = int(min(max(est_vmem * 3 // 2 + (4 << 20), 32 << 20), 100 << 20))

    # Advisory cost estimate so XLA can overlap the surrounding layout ops.
    flops = 2 * n * m * cin * (kh * kw + coutp)
    bytes_accessed = (n * hp * wp * cin * 4           # x, once per batch elem
                      + n * cin * coutp * bpe_pw      # pw weights, per batch
                      + n * m * coutp * 4             # output
                      + kh * kw * cin * 4)
    cost = pl.CostEstimate(flops=flops, transcendentals=0,
                           bytes_accessed=bytes_accessed)

    kern = functools.partial(
        _sepconv_kernel, kh=kh, kw=kw, dilation=dilation,
        ho=ho1, wo=wo1, has_bias=has_bias)

    # TODO(synk): for large spatial sizes (real Xception at 147x147+) this
    # whole-image-per-batch block exceeds the budget; needs a row-tiled grid
    # with halo DMA (memory_space=pl.ANY + make_async_copy).
    y = pl.pallas_call(
        kern,
        grid=(n, n_ct),
        in_specs=in_specs,
        out_specs=pl.BlockSpec((1, m, tcout), lambda b, j: (b, 0, j)),
        out_shape=jax.ShapeDtypeStruct((n, m, coutp), jnp.float32),
        scratch_shapes=[pltpu.VMEM((m, cin), acc_dtype)],
        compiler_params=pltpu.CompilerParams(
            # NOTE: axis 1 (Cout tiles) must stay innermost + "arbitrary";
            # acc_ref written at j==0 is reused by j>0 steps.
            dimension_semantics=("parallel", "arbitrary"),
            vmem_limit_bytes=vmem_limit),
        cost_estimate=cost,
    )(*args)

    # (N, Ho1*Wo1, Coutp) -> decimate for stride, drop Cout padding, and return
    # the torch NCHW layout.
    y = y.reshape(n, ho1, wo1, coutp)
    if stride != 1:
        y = y[:, ::stride, ::stride, :]
    if coutp != cout:
        y = y[..., :cout]
    return jnp.transpose(y, (0, 3, 1, 2))


# --------------------------- pure-JAX reference ------------------------------

def separable_conv2d_reference(x, dw_w, pw_w, dw_b, pw_b,
                               stride, padding, dilation):
    dn = ("NCHW", "OIHW", "NCHW")
    y = jax.lax.conv_general_dilated(
        x, dw_w, window_strides=(stride, stride),
        padding=[(padding, padding), (padding, padding)],
        rhs_dilation=(dilation, dilation),
        dimension_numbers=dn, feature_group_count=x.shape[1])
    if dw_b is not None:
        y = y + dw_b.reshape(1, -1, 1, 1)
    y = jax.lax.conv_general_dilated(
        y, pw_w, window_strides=(1, 1), padding=[(0, 0), (0, 0)],
        dimension_numbers=dn)
    if pw_b is not None:
        y = y + pw_b.reshape(1, -1, 1, 1)
    return y


# ----------------------------------- main ------------------------------------

if __name__ == "__main__":
    key = jax.random.PRNGKey(0)
    ks = jax.random.split(key, 8)

    # Config A: Xception-style usage -- 3x3 depthwise, stride 1, pad 1, no bias.
    N, Cin, H, W, Cout, K = 2, 32, 16, 16, 64, 3
    x = jax.random.normal(ks[0], (N, Cin, H, W), jnp.float32)
    dw_w = jax.random.normal(ks[1], (Cin, 1, K, K), jnp.float32) * (2.0 / (K * K)) ** 0.5
    pw_w = jax.random.normal(ks[2], (Cout, Cin, 1, 1), jnp.float32) * (2.0 / Cin) ** 0.5

    ref = separable_conv2d_reference(x, dw_w, pw_w, None, None, 1, 1, 1)

    # Default (bf16 MXU) path.
    out = jax.block_until_ready(
        separable_conv2d(x, dw_w, pw_w, stride=1, padding=1, dilation=1))
    assert out.shape == (N, Cout, H, W), out.shape
    assert bool(jnp.all(jnp.isfinite(out)))
    assert bool(jnp.allclose(out, ref, rtol=5e-2, atol=5e-2)), \
        float(jnp.max(jnp.abs(out - ref)))

    # Exact f32 path, tight tolerance.
    out_f32 = jax.block_until_ready(
        separable_conv2d(x, dw_w, pw_w, stride=1, padding=1, mxu_bf16=False))
    assert bool(jnp.allclose(out_f32, ref, rtol=2e-3, atol=2e-3)), \
        float(jnp.max(jnp.abs(out_f32 - ref)))

    # Config B: module defaults -- kernel_size=1, stride=1, padding=0,
    # bias=True, Cout=48 (exercises the Cout->128 padding / lane-dense tiles).
    Cout_b = 48
    dw_w1 = jax.random.normal(ks[3], (Cin, 1, 1, 1), jnp.float32)
    pw_w1 = jax.random.normal(ks[4], (Cout_b, Cin, 1, 1), jnp.float32) * (1.0 / Cin) ** 0.5
    dw_b1 = 0.1 * jax.random.normal(ks[5], (Cin,), jnp.float32)
    pw_b1 = 0.1 * jax.random.normal(ks[6], (Cout_b,), jnp.float32)
    out_b = jax.block_until_ready(
        separable_conv2d(x, dw_w1, pw_w1, dw_b1, pw_b1, stride=1, padding=0))
    ref_b = separable_conv2d_reference(x, dw_w1, pw_w1, dw_b1, pw_b1, 1, 0, 1)
    assert out_b.shape == (N, Cout_b, H, W), out_b.shape
    assert bool(jnp.allclose(out_b, ref_b, rtol=5e-2, atol=5e-2))

    # Config C: stride=2 (wrapper decimation path), f32, tight tolerance.
    out_c = jax.block_until_ready(
        separable_conv2d(x, dw_w, pw_w, stride=2, padding=1, mxu_bf16=False))
    ref_c = separable_conv2d_reference(x, dw_w, pw_w, None, None, 2, 1, 1)
    assert out_c.shape == ref_c.shape, (out_c.shape, ref_c.shape)
    assert bool(jnp.allclose(out_c, ref_c, rtol=2e-3, atol=2e-3))

    print("KERNEL_OK")
</pallas_src>

<mosaic_0001>
module attributes {stable_mosaic.version = 11 : i64} {
  func.func @_sepconv_kernel(%arg0: i32, %arg1: i32, %arg2: memref<1x18x18x32xf32, #tpu.memory_space<vmem>>, %arg3: memref<9x1x32xf32, #tpu.memory_space<vmem>>, %arg4: memref<32x128xbf16, #tpu.memory_space<vmem>>, %arg5: memref<1x256x128xf32, #tpu.memory_space<vmem>>, %arg6: memref<256x32xbf16, #tpu.memory_space<vmem>>) attributes {dimension_semantics = [#tpu.dimension_semantics<parallel>, #tpu.dimension_semantics<arbitrary>], iteration_bounds = array<i64: 2, 1>, scalar_prefetch = 0 : i64, scratch_operands = 1 : i64, tpu.core_type = #tpu.core_type<tc>, window_params = [{transform_indices = @transform_0, window_bounds = array<i64: 1, 18, 18, 32>}, {pipeline_mode = #tpu.pipeline_mode<synchronous>, transform_indices = @transform_1, window_bounds = array<i64: 9, 1, 32>}, {transform_indices = @transform_2, window_bounds = array<i64: 32, 128>}, {transform_indices = @transform_3, window_bounds = array<i64: 1, 256, 128>}]} {
    %c0_i32 = arith.constant 0 : i32
    %0 = arith.cmpi eq, %arg1, %c0_i32 : i32
    %1 = arith.extui %0 : i1 to i32
    %c0_i32_0 = arith.constant 0 : i32
    %2 = arith.cmpi ne, %1, %c0_i32_0 : i32
    scf.if %2 {
      %c0_7 = arith.constant 0 : index
      %c0_8 = arith.constant 0 : index
      %c0_9 = arith.constant 0 : index
      %c0_10 = arith.constant 0 : index
      %9 = vector.load %arg2[%c0_7, %c0_8, %c0_9, %c0_10] : memref<1x18x18x32xf32, #tpu.memory_space<vmem>>, vector<1x18x18x32xf32>
      %10 = vector.shape_cast %9 : vector<1x18x18x32xf32> to vector<18x18x32xf32>
      %c0_11 = arith.constant 0 : index
      %c0_12 = arith.constant 0 : index
      %c0_13 = arith.constant 0 : index
      %11 = vector.load %arg3[%c0_11, %c0_12, %c0_13] : memref<9x1x32xf32, #tpu.memory_space<vmem>>, vector<9x1x32xf32>
      %12 = vector.extract_strided_slice %10 {offsets = [0, 0, 0], sizes = [16, 16, 32], strides = [1, 1, 1]} : vector<18x18x32xf32> to vector<16x16x32xf32>
      %13 = vector.extract_strided_slice %11 {offsets = [0, 0, 0], sizes = [1, 1, 32], strides = [1, 1, 1]} : vector<9x1x32xf32> to vector<1x1x32xf32>
      %14 = vector.shape_cast %13 : vector<1x1x32xf32> to vector<1x32xf32>
      %15 = vector.shape_cast %14 : vector<1x32xf32> to vector<1x1x32xf32>
      %16 = vector.broadcast %15 : vector<1x1x32xf32> to vector<16x16x32xf32>
      %17 = arith.mulf %12, %16 : vector<16x16x32xf32>
      %18 = vector.extract_strided_slice %10 {offsets = [0, 1, 0], sizes = [16, 16, 32], strides = [1, 1, 1]} : vector<18x18x32xf32> to vector<16x16x32xf32>
      %19 = vector.extract_strided_slice %11 {offsets = [1, 0, 0], sizes = [1, 1, 32], strides = [1, 1, 1]} : vector<9x1x32xf32> to vector<1x1x32xf32>
      %20 = vector.shape_cast %19 : vector<1x1x32xf32> to vector<1x32xf32>
      %21 = vector.shape_cast %20 : vector<1x32xf32> to vector<1x1x32xf32>
      %22 = vector.broadcast %21 : vector<1x1x32xf32> to vector<16x16x32xf32>
      %23 = arith.mulf %18, %22 : vector<16x16x32xf32>
      %24 = arith.addf %17, %23 : vector<16x16x32xf32>
      %25 = vector.extract_strided_slice %10 {offsets = [0, 2, 0], sizes = [16, 16, 32], strides = [1, 1, 1]} : vector<18x18x32xf32> to vector<16x16x32xf32>
      %26 = vector.extract_strided_slice %11 {offsets = [2, 0, 0], sizes = [1, 1, 32], strides = [1, 1, 1]} : vector<9x1x32xf32> to vector<1x1x32xf32>
      %27 = vector.shape_cast %26 : vector<1x1x32xf32> to vector<1x32xf32>
      %28 = vector.shape_cast %27 : vector<1x32xf32> to vector<1x1x32xf32>
      %29 = vector.broadcast %28 : vector<1x1x32xf32> to vector<16x16x32xf32>
      %30 = arith.mulf %25, %29 : vector<16x16x32xf32>
      %31 = arith.addf %24, %30 : vector<16x16x32xf32>
      %32 = vector.extract_strided_slice %10 {offsets = [1, 0, 0], sizes = [16, 16, 32], strides = [1, 1, 1]} : vector<18x18x32xf32> to vector<16x16x32xf32>
      %33 = vector.extract_strided_slice %11 {offsets = [3, 0, 0], sizes = [1, 1, 32], strides = [1, 1, 1]} : vector<9x1x32xf32> to vector<1x1x32xf32>
      %34 = vector.shape_cast %33 : vector<1x1x32xf32> to vector<1x32xf32>
      %35 = vector.shape_cast %34 : vector<1x32xf32> to vector<1x1x32xf32>
      %36 = vector.broadcast %35 : vector<1x1x32xf32> to vector<16x16x32xf32>
      %37 = arith.mulf %32, %36 : vector<16x16x32xf32>
      %38 = arith.addf %31, %37 : vector<16x16x32xf32>
      %39 = vector.extract_strided_slice %10 {offsets = [1, 1, 0], sizes = [16, 16, 32], strides = [1, 1, 1]} : vector<18x18x32xf32> to vector<16x16x32xf32>
      %40 = vector.extract_strided_slice %11 {offsets = [4, 0, 0], sizes = [1, 1, 32], strides = [1, 1, 1]} : vector<9x1x32xf32> to vector<1x1x32xf32>
      %41 = vector.shape_cast %40 : vector<1x1x32xf32> to vector<1x32xf32>
      %42 = vector.shape_cast %41 : vector<1x32xf32> to vector<1x1x32xf32>
      %43 = vector.broadcast %42 : vector<1x1x32xf32> to vector<16x16x32xf32>
      %44 = arith.mulf %39, %43 : vector<16x16x32xf32>
      %45 = arith.addf %38, %44 : vector<16x16x32xf32>
      %46 = vector.extract_strided_slice %10 {offsets = [1, 2, 0], sizes = [16, 16, 32], strides = [1, 1, 1]} : vector<18x18x32xf32> to vector<16x16x32xf32>
      %47 = vector.extract_strided_slice %11 {offsets = [5, 0, 0], sizes = [1, 1, 32], strides = [1, 1, 1]} : vector<9x1x32xf32> to vector<1x1x32xf32>
      %48 = vector.shape_cast %47 : vector<1x1x32xf32> to vector<1x32xf32>
      %49 = vector.shape_cast %48 : vector<1x32xf32> to vector<1x1x32xf32>
      %50 = vector.broadcast %49 : vector<1x1x32xf32> to vector<16x16x32xf32>
      %51 = arith.mulf %46, %50 : vector<16x16x32xf32>
      %52 = arith.addf %45, %51 : vector<16x16x32xf32>
      %53 = vector.extract_strided_slice %10 {offsets = [2, 0, 0], sizes = [16, 16, 32], strides = [1, 1, 1]} : vector<18x18x32xf32> to vector<16x16x32xf32>
      %54 = vector.extract_strided_slice %11 {offsets = [6, 0, 0], sizes = [1, 1, 32], strides = [1, 1, 1]} : vector<9x1x32xf32> to vector<1x1x32xf32>
      %55 = vector.shape_cast %54 : vector<1x1x32xf32> to vector<1x32xf32>
      %56 = vector.shape_cast %55 : vector<1x32xf32> to vector<1x1x32xf32>
      %57 = vector.broadcast %56 : vector<1x1x32xf32> to vector<16x16x32xf32>
      %58 = arith.mulf %53, %57 : vector<16x16x32xf32>
      %59 = arith.addf %52, %58 : vector<16x16x32xf32>
      %60 = vector.extract_strided_slice %10 {offsets = [2, 1, 0], sizes = [16, 16, 32], strides = [1, 1, 1]} : vector<18x18x32xf32> to vector<16x16x32xf32>
      %61 = vector.extract_strided_slice %11 {offsets = [7, 0, 0], sizes = [1, 1, 32], strides = [1, 1, 1]} : vector<9x1x32xf32> to vector<1x1x32xf32>
      %62 = vector.shape_cast %61 : vector<1x1x32xf32> to vector<1x32xf32>
      %63 = vector.shape_cast %62 : vector<1x32xf32> to vector<1x1x32xf32>
      %64 = vector.broadcast %63 : vector<1x1x32xf32> to vector<16x16x32xf32>
      %65 = arith.mulf %60, %64 : vector<16x16x32xf32>
      %66 = arith.addf %59, %65 : vector<16x16x32xf32>
      %67 = vector.extract_strided_slice %10 {offsets = [2, 2, 0], sizes = [16, 16, 32], strides = [1, 1, 1]} : vector<18x18x32xf32> to vector<16x16x32xf32>
      %68 = vector.extract_strided_slice %11 {offsets = [8, 0, 0], sizes = [1, 1, 32], strides = [1, 1, 1]} : vector<9x1x32xf32> to vector<1x1x32xf32>
      %69 = vector.shape_cast %68 : vector<1x1x32xf32> to vector<1x32xf32>
      %70 = vector.shape_cast %69 : vector<1x32xf32> to vector<1x1x32xf32>
      %71 = vector.broadcast %70 : vector<1x1x32xf32> to vector<16x16x32xf32>
      %72 = arith.mulf %67, %71 : vector<16x16x32xf32>
      %73 = arith.addf %66, %72 : vector<16x16x32xf32>
      %74 = vector.shape_cast %73 : vector<16x16x32xf32> to vector<256x32xf32>
      %75 = arith.truncf %74 : vector<256x32xf32> to vector<256x32xbf16>
      %c0_14 = arith.constant 0 : index
      %c0_15 = arith.constant 0 : index
      %76 = vector.load %arg6[%c0_14, %c0_15] : memref<256x32xbf16, #tpu.memory_space<vmem>>, vector<256x32xbf16>
      tpu.vector_store %arg6[%c0_14, %c0_15], %75 {strides = array<i32>} : memref<256x32xbf16, #tpu.memory_space<vmem>>, vector<256x32xbf16>,
    } else {
    }
    %c0 = arith.constant 0 : index
    %c0_1 = arith.constant 0 : index
    %3 = vector.load %arg6[%c0, %c0_1] : memref<256x32xbf16, #tpu.memory_space<vmem>>, vector<256x32xbf16>
    %c0_2 = arith.constant 0 : index
    %c0_3 = arith.constant 0 : index
    %4 = vector.load %arg4[%c0_2, %c0_3] : memref<32x128xbf16, #tpu.memory_space<vmem>>, vector<32x128xbf16>
    %cst = arith.constant dense<0.000000e+00> : vector<256x128xf32>
    %5 = tpu.matmul %3, %4, %cst {dimension_numbers = #tpu.dot_dimension_numbers<[1], [0], [0], [1], [0, 0, 1, 1], [], []>} : vector<256x32xbf16>, vector<32x128xbf16>, vector<256x128xf32> -> vector<256x128xf32>
    %c0_4 = arith.constant 0 : index
    %c0_5 = arith.constant 0 : index
    %c0_6 = arith.constant 0 : index
    %6 = vector.load %arg5[%c0_4, %c0_5, %c0_6] : memref<1x256x128xf32, #tpu.memory_space<vmem>>, vector<1x256x128xf32>
    %7 = vector.shape_cast %6 : vector<1x256x128xf32> to vector<256x128xf32>
    %8 = vector.shape_cast %5 : vector<256x128xf32> to vector<1x256x128xf32>
    tpu.vector_store %arg5[%c0_4, %c0_5, %c0_6], %8 {strides = array<i32>} : memref<1x256x128xf32, #tpu.memory_space<vmem>>, vector<1x256x128xf32>,
    return
  }
  func.func @transform_0(%arg0: i32, %arg1: i32) -> (i32, i32, i32, i32) {
    %c0_i32 = arith.constant 0 : i32
    %c0_i32_0 = arith.constant 0 : i32
    %c0_i32_1 = arith.constant 0 : i32
    %c0_i32_2 = arith.constant 0 : i32
    return %arg0, %c0_i32, %c0_i32_0, %c0_i32_1 : i32, i32, i32, i32
  }
  func.func @transform_1(%arg0: i32, %arg1: i32) -> (i32, i32, i32) {
    %c0_i32 = arith.constant 0 : i32
    %c0_i32_0 = arith.constant 0 : i32
    %c0_i32_1 = arith.constant 0 : i32
    %c0_i32_2 = arith.constant 0 : i32
    return %c0_i32, %c0_i32_0, %c0_i32_1 : i32, i32, i32
  }
  func.func @transform_2(%arg0: i32, %arg1: i32) -> (i32, i32) {
    %c0_i32 = arith.constant 0 : i32
    %c0_i32_0 = arith.constant 0 : i32
    return %c0_i32, %arg1 : i32, i32
  }
  func.func @transform_3(%arg0: i32, %arg1: i32) -> (i32, i32, i32) {
    %c0_i32 = arith.constant 0 : i32
    %c0_i32_0 = arith.constant 0 : i32
    return %arg0, %c0_i32, %arg1 : i32, i32, i32
  }
}

</mosaic_0001>

<llo_original>
// kernel: separable_conv2d.1
$region0: #{separable_conv2d.1}
  #allocation0 [shape = 'u32[]', space=smem, size = 0x4, offset = 0x4, fixed_abs, tag = 'smem constant byte address 0x4 - core index']
  #allocation1 [shape = 'u32[72,128]{1,0:T(1,128)}', space=vmem, size = 0x9000, scoped, tag = 'internal scratch']
  #allocation2 [shape = 'bf16[256,32]{1,0:T(8,128)(2,1)}', space=vmem, size = 0x10000, scoped, tag = 'scratch operand']
  %s0 = inlined_call_operand.vmem [shape: f32[2,18,18,32], index: 0, kind: input, shape index: {}]
  %s1 = inlined_call_operand.vmem [shape: f32[9,1,32], index: 1, kind: input, shape index: {}]
  %s2 = inlined_call_operand.vmem [shape: bf16[32,128], index: 2, kind: input, shape index: {}]
  %s3 = inlined_call_operand.vmem [shape: f32[2,256,128], index: 3, kind: output, shape index: {}]
  %s4 = sld [smem:[#allocation0]]
  $region49: #{separable_conv2d.1} parent=0
    _
  %s6 = ssub.s32 1, %s4
  %s7 = scalar_select 0, %s6, %s4
  loop: start=0, step=1, limit=4
  $region2: #{separable_conv2d.1} parent=0 // loop_pre_header
    _
  $region3: #{separable_conv2d.1} parent=0 // loop_header
    %s9 = sphi 0, %s13
    %p10 = scmp.ge.s32.totalorder %s9, 4
    %s16 = sphi 0, %s28
    %s17 = sphi 0, %s24
    %s18 = sphi 0, %s16
    %s19 = sphi 0, %s17
    %s20 = sphi 0, %s18
    %s21 = sphi 0, %s19
    %s31 = sphi 0, %s33
    %s34 = sphi 0, %s31
    %s35 = sphi 0, %s34
    %s51 = sphi 0, %s35
    %s55 = sphi 0, %s55
    %s57 = sphi 0, %s55
    %s58 = sphi 0, %s57
    %s72 = sphi 0, %s58
    %s78 = sphi 0, %s80
    %s81 = sphi 0, %s78
    %s82 = sphi 0, %s81
    %s98 = sphi 0, %s82
    %s106 = sphi 0, %s108
    %s109 = sphi 0, %s106
    %s110 = sphi 0, %s109
    %s126 = sphi 0, %s110
  $region4: #{separable_conv2d.1} parent=0 // loop_header_branch
    %12 = sbr.rel (%p10) target = $region8
  $region5: #{separable_conv2d.1} parent=0 // loop_body
    %s14 = ssub.s32 %s9, 1
    %s15 = ssub.s32 %s9, 2
    %s22 = sadd.s32 1, %s17
    %p23 = scmp.ge.s32.totalorder %s22, 1
    %s24 = scalar_select %p23, 0, %s22
    %s25 = sadd.s32 1, %s16
    %s26 = scalar_select %p23, %s25, %s16
    %p27 = scmp.ge.s32.totalorder %s26, 2
    %s28 = scalar_select %p27, 0, %s26
    %s29 = ssub.s32 %s16, %s28
    %p30 = scmp.eq.s32.totalorder %s29, 0
    %s32 = sadd.s32 %s31, 1
    %s33 = scalar_select %p30, %s31, %s32
    %p36 = pneg %p30
    %p37 = scmp.eq.s32.totalorder %s9, 1
    %p38 = por %p36, %p37
    %p39 = scmp.ne.s32.totalorder %s31, %s34
    %p40 = scmp.eq.s32.totalorder %s9, 0
    %p41 = por %p39, %p40
    %p42 = scmp.ne.s32.totalorder %s31, %s34
    %p43 = scmp.eq.s32.totalorder %s14, 1
    %p44 = por %p42, %p43
    %p45 = scmp.ne.s32.totalorder %s34, %s35
    %p46 = scmp.eq.s32.totalorder %s14, 0
    %p47 = por %p45, %p46
    %p48 = scmp.ne.s32.totalorder %s34, %s35
    %p49 = scmp.eq.s32.totalorder %s15, 1
    %p50 = por %p48, %p49
    %p52 = scmp.ne.s32.totalorder %s35, %s51
    %p53 = scmp.eq.s32.totalorder %s15, 0
    %p54 = por %p52, %p53
    %s56 = sadd.s32 %s55, 1
    %p59 = scmp.eq.s32.totalorder %s9, 1
    %p60 = scmp.ne.s32.totalorder %s55, %s57
    %p61 = scmp.eq.s32.totalorder %s9, 0
    %p62 = por %p60, %p61
    %p63 = scmp.ne.s32.totalorder %s55, %s57
    %p64 = scmp.eq.s32.totalorder %s14, 1
    %p65 = por %p63, %p64
    %p66 = scmp.ne.s32.totalorder %s57, %s58
    %p67 = scmp.eq.s32.totalorder %s14, 0
    %p68 = por %p66, %p67
    %p69 = scmp.ne.s32.totalorder %s57, %s58
    %p70 = scmp.eq.s32.totalorder %s15, 1
    %p71 = por %p69, %p70
    %p73 = scmp.ne.s32.totalorder %s58, %s72
    %p74 = scmp.eq.s32.totalorder %s15, 0
    %p75 = por %p73, %p74
    %s76 = ssub.s32 %s17, %s24
    %p77 = scmp.eq.s32.totalorder %s76, 0
    %s79 = sadd.s32 %s78, 1
    %s80 = scalar_select %p77, %s78, %s79
    %p83 = pneg %p77
    %p84 = scmp.eq.s32.totalorder %s9, 1
    %p85 = por %p83, %p84
    %p86 = scmp.ne.s32.totalorder %s78, %s81
    %p87 = scmp.eq.s32.totalorder %s9, 0
    %p88 = por %p86, %p87
    %p89 = scmp.ne.s32.totalorder %s78, %s81
    %p90 = scmp.eq.s32.totalorder %s14, 1
    %p91 = por %p89, %p90
    %p92 = scmp.ne.s32.totalorder %s81, %s82
    %p93 = scmp.eq.s32.totalorder %s14, 0
    %p94 = por %p92, %p93
    %p95 = scmp.ne.s32.totalorder %s81, %s82
    %p96 = scmp.eq.s32.totalorder %s15, 1
    %p97 = por %p95, %p96
    %p99 = scmp.ne.s32.totalorder %s82, %s98
    %p100 = scmp.eq.s32.totalorder %s15, 0
    %p101 = por %p99, %p100
    %s102 = ssub.s32 %s16, %s28
    %s103 = ssub.s32 %s17, %s24
    %s104 = sor.u32 %s102, %s103
    %p105 = scmp.eq.s32.totalorder %s104, 0
    %s107 = sadd.s32 %s106, 1
    %s108 = scalar_select %p105, %s106, %s107
    %p111 = pneg %p105
    %p112 = scmp.eq.s32.totalorder %s9, 1
    %p113 = por %p111, %p112
    %p114 = scmp.ne.s32.totalorder %s106, %s109
    %p115 = scmp.eq.s32.totalorder %s9, 0
    %p116 = por %p114, %p115
    %p117 = scmp.ne.s32.totalorder %s106, %s109
    %p118 = scmp.eq.s32.totalorder %s14, 1
    %p119 = por %p117, %p118
    %p120 = scmp.ne.s32.totalorder %s109, %s110
    %p121 = scmp.eq.s32.totalorder %s14, 0
    %p122 = por %p120, %p121
    %p123 = scmp.ne.s32.totalorder %s109, %s110
    %p124 = scmp.eq.s32.totalorder %s15, 1
    %p125 = por %p123, %p124
    %p127 = scmp.ne.s32.totalorder %s110, %s126
    %p128 = scmp.eq.s32.totalorder %s15, 0
    %p129 = por %p127, %p128
    %p130 = scmp.le.s32.totalorder 1, %s9
    %p131 = scmp.lt.s32.totalorder %s9, 3
    %p132 = pnand %p130, %p131
    %p133 = pneg %p132
    // Predicated region
    $region9: #{separable_conv2d.1} parent=5 // pred_check
      _
    $region10: #{separable_conv2d.1} parent=5 // pred_check_branch
      %135 = sbr.rel (%p132) target = $region12
    $region11: #{separable_conv2d.1} parent=5 // pred_region
      %s136 = ssub.s32 %s9, 1
      // Predicated region
      $region13: #{separable_conv2d.1} parent=11 // pred_check
        %p137 = pneg %p68
      $region14: #{separable_conv2d.1} parent=11 // pred_check_branch
        %139 = sbr.rel (%p137) target = $region16
      $region15: #{separable_conv2d.1} parent=11 // pred_region
        _
      $region16: #{separable_conv2d.1} parent=11 // pred_fallthru
        _
      // Predicated region
      $region17: #{separable_conv2d.1} parent=11 // pred_check
        %p140 = pneg %p94
      $region18: #{separable_conv2d.1} parent=11 // pred_check_branch
        %142 = sbr.rel (%p140) target = $region20
      $region19: #{separable_conv2d.1} parent=11 // pred_region
        %p143 = scmp.lt.s32.totalorder %s19, 0
        %s144 = scalar_select %p143, %s19, 0
        %s145 = smul.addr %s144, 4
        %s146 = scalar_lea.vmem %s2, %s145
      $region20: #{separable_conv2d.1} parent=11 // pred_fallthru
        _
    $region12: #{separable_conv2d.1} parent=5 // pred_fallthru
      _
    %p147 = scmp.lt.s32.totalorder %s9, 2
    // Predicated region
    $region21: #{separable_conv2d.1} parent=5 // pred_check
      %p148 = pneg %p147
    $region22: #{separable_conv2d.1} parent=5 // pred_check_branch
      %150 = sbr.rel (%p148) target = $region24
    $region23: #{separable_conv2d.1} parent=5 // pred_region
      // Predicated region
      $region25: #{separable_conv2d.1} parent=23 // pred_check
        %p151 = pneg %p41
      $region26: #{separable_conv2d.1} parent=23 // pred_check_branch
        %153 = sbr.rel (%p151) target = $region28
      $region27: #{separable_conv2d.1} parent=23 // pred_region
        %p154 = scmp.lt.s32.totalorder %s16, 1
        %s155 = scalar_select %p154, %s16, 1
        %s156 = smul.addr %s155, 54
        %s157 = smul.addr %s156, 8
        %s158 = scalar_lea.vmem %s0, %s157
      $region28: #{separable_conv2d.1} parent=23 // pred_fallthru
        _
    $region24: #{separable_conv2d.1} parent=5 // pred_fallthru
      _
    %p159 = scmp.le.s32.totalorder 1, %s9
    %p160 = scmp.lt.s32.totalorder %s9, 3
    %p161 = pnand %p159, %p160
    %p162 = pneg %p161
    // Predicated region
    $region29: #{separable_conv2d.1} parent=5 // pred_check
      _
    $region30: #{separable_conv2d.1} parent=5 // pred_check_branch
      %164 = sbr.rel (%p161) target = $region32
    $region31: #{separable_conv2d.1} parent=5 // pred_region
      %s165 = ssub.s32 %s9, 1
      %p166 = scmp.lt.s32.totalorder %s18, 1
      %s167 = scalar_select %p166, %s18, 1
      %s168 = smul.addr %s167, 54
      %s169 = smul.addr %s168, 8
      %s170 = scalar_lea.vmem %s0, %s169
      %p171 = pneg %p47
      %p172 = pneg %p44
      %p173 = pneg %p68
      %p174 = pneg %p65
      %p175 = scmp.lt.s32.totalorder %s19, 0
      %s176 = scalar_select %p175, %s19, 0
      %s177 = smul.addr %s176, 4
      %s178 = scalar_lea.vmem %s2, %s177
      %p179 = pneg %p94
      %p180 = pneg %p91
      %p181 = pneg %p122
      %p182 = pneg %p119
      %p183 = scmp.lt.s32.totalorder %s18, 1
      %s184 = scalar_select %p183, %s18, 1
      %p185 = scmp.lt.s32.totalorder %s19, 0
      %s186 = scalar_select %p185, %s19, 0
      %s187 = smul.addr %s184, 32
      %s188 = sadd.s32 %s186, %s187
      %s189 = smul.addr %s188, 8
      %s190 = scalar_lea.vmem %s3, %s189
      %p191 = scmp.lt.s32.totalorder %s18, 1
      %s192 = scalar_select %p191, %s18, 1
      %s193 = smul.addr %s192, 54
      %s194 = smul.addr %s193, 8
      %s195 = scalar_lea.vmem %s0, %s194
      %p196 = scmp.lt.s32.totalorder %s19, 0
      %s197 = scalar_select %p196, %s19, 0
      %s198 = smul.addr %s197, 4
      %s199 = scalar_lea.vmem %s2, %s198
      %p200 = scmp.lt.s32.totalorder %s18, 1
      %s201 = scalar_select %p200, %s18, 1
      %p202 = scmp.lt.s32.totalorder %s19, 0
      %s203 = scalar_select %p202, %s19, 0
      %s204 = smul.addr %s201, 32
      %s205 = sadd.s32 %s203, %s204
      %s206 = smul.addr %s205, 8
      %s207 = scalar_lea.vmem %s3, %s206
      %p209 = scmp.eq.s32.totalorder %s19, 0
      // Predicated region
      $region33: #{separable_conv2d.1} parent=31 // pred_check
        %p210 = pneg %p209
      $region34: #{separable_conv2d.1} parent=31 // pred_check_branch
        %212 = sbr.rel (%p210) target = $region36
      $region35: #{separable_conv2d.1} parent=31 // pred_region
        %v213 = vld [vmem:[%s195] sm:$0xff]
        %v214 = vld [vmem:[%s195 + $0x8] sm:$0xff]
        %v215 = vld [vmem:[%s195 + $0x10] sm:$0x3]
        %v216 = vld [vmem:[%s195 + $0x18] sm:$0xff]
        %v217 = vld [vmem:[%s195 + $0x20] sm:$0xff]
        %v218 = vld [vmem:[%s195 + $0x28] sm:$0x3]
        %v219 = vld [vmem:[%s195 + $0x30] sm:$0xff]
        %v220 = vld [vmem:[%s195 + $0x38] sm:$0xff]
        %v221 = vld [vmem:[%s195 + $0x40] sm:$0x3]
        %v222 = vld [vmem:[%s195 + $0x48] sm:$0xff]
        %v223 = vld [vmem:[%s195 + $0x50] sm:$0xff]
        %v224 = vld [vmem:[%s195 + $0x58] sm:$0x3]
        %v225 = vld [vmem:[%s195 + $0x60] sm:$0xff]
        %v226 = vld [vmem:[%s195 + $0x68] sm:$0xff]
        %v227 = vld [vmem:[%s195 + $0x70] sm:$0x3]
        %v228 = vld [vmem:[%s195 + $0x78] sm:$0xff]
        %v229 = vld [vmem:[%s195 + $0x80] sm:$0xff]
        %v230 = vld [vmem:[%s195 + $0x88] sm:$0x3]
        %v231 = vld [vmem:[%s195 + $0x90] sm:$0xff]
        %v232 = vld [vmem:[%s195 + $0x98] sm:$0xff]
        %v233 = vld [vmem:[%s195 + $0xa0] sm:$0x3]
        %v234 = vld [vmem:[%s195 + $0xa8] sm:$0xff]
        %v235 = vld [vmem:[%s195 + $0xb0] sm:$0xff]
        %v236 = vld [vmem:[%s195 + $0xb8] sm:$0x3]
        %v237 = vld [vmem:[%s195 + $0xc0] sm:$0xff]
        %v238 = vld [vmem:[%s195 + $0xc8] sm:$0xff]
        %v239 = vld [vmem:[%s195 + $0xd0] sm:$0x3]
        %v240 = vld [vmem:[%s195 + $0xd8] sm:$0xff]
        %v241 = vld [vmem:[%s195 + $0xe0] sm:$0xff]
        %v242 = vld [vmem:[%s195 + $0xe8] sm:$0x3]
        %v243 = vld [vmem:[%s195 + $0xf0] sm:$0xff]
        %v244 = vld [vmem:[%s195 + $0xf8] sm:$0xff]
        %v245 = vld [vmem:[%s195 + $0x100] sm:$0x3]
        %v246 = vld [vmem:[%s195 + $0x108] sm:$0xff]
        %v247 = vld [vmem:[%s195 + $0x110] sm:$0xff]
        %v248 = vld [vmem:[%s195 + $0x118] sm:$0x3]
        %v249 = vld [vmem:[%s195 + $0x120] sm:$0xff]
        %v250 = vld [vmem:[%s195 + $0x128] sm:$0xff]
        %v251 = vld [vmem:[%s195 + $0x130] sm:$0x3]
        %v252 = vld [vmem:[%s195 + $0x138] sm:$0xff]
        %v253 = vld [vmem:[%s195 + $0x140] sm:$0xff]
        %v254 = vld [vmem:[%s195 + $0x148] sm:$0x3]
        %v255 = vld [vmem:[%s195 + $0x150] sm:$0xff]
        %v256 = vld [vmem:[%s195 + $0x158] sm:$0xff]
        %v257 = vld [vmem:[%s195 + $0x160] sm:$0x3]
        %v258 = vld [vmem:[%s195 + $0x168] sm:$0xff]
        %v259 = vld [vmem:[%s195 + $0x170] sm:$0xff]
        %v260 = vld [vmem:[%s195 + $0x178] sm:$0x3]
        %v261 = vld [vmem:[%s195 + $0x180] sm:$0xff]
        %v262 = vld [vmem:[%s195 + $0x188] sm:$0xff]
        %v263 = vld [vmem:[%s195 + $0x190] sm:$0x3]
        %v264 = vld [vmem:[%s195 + $0x198] sm:$0xff]
        %v265 = vld [vmem:[%s195 + $0x1a0] sm:$0xff]
        %v266 = vld [vmem:[%s195 + $0x1a8] sm:$0x3]
        %v267 = vld [vmem:[%s1] sm:$0x1]
        %v268 = vld [vmem:[%s1 + $0x1] sm:$0x1]
        %v269 = vld [vmem:[%s1 + $0x2] sm:$0x1]
        %v270 = vld [vmem:[%s1 + $0x3] sm:$0x1]
        %v271 = vld [vmem:[%s1 + $0x4] sm:$0x1]
        %v272 = vld [vmem:[%s1 + $0x5] sm:$0x1]
        %v273 = vld [vmem:[%s1 + $0x6] sm:$0x1]
        %v274 = vld [vmem:[%s1 + $0x7] sm:$0x1]
        %v275 = vld [vmem:[%s1 + $0x8] sm:$0x1]
        %v277 = vperm.slane %v267, 0
        %v279 = vmul.f32 %v213, %v277
        %v280 = vmul.f32 %v214, %v277
        %v281 = vmul.f32 %v216, %v277
        %v282 = vmul.f32 %v217, %v277
        %v283 = vmul.f32 %v219, %v277
        %v284 = vmul.f32 %v220, %v277
        %v285 = vmul.f32 %v222, %v277
        %v286 = vmul.f32 %v223, %v277
        %v287 = vmul.f32 %v225, %v277
        %v288 = vmul.f32 %v226, %v277
        %v289 = vmul.f32 %v228, %v277
        %v290 = vmul.f32 %v229, %v277
        %v291 = vmul.f32 %v231, %v277
        %v292 = vmul.f32 %v232, %v277
        %v293 = vmul.f32 %v234, %v277
        %v294 = vmul.f32 %v235, %v277
        %v295 = vmul.f32 %v237, %v277
        %v296 = vmul.f32 %v238, %v277
        %v297 = vmul.f32 %v240, %v277
        %v298 = vmul.f32 %v241, %v277
        %v299 = vmul.f32 %v243, %v277
        %v300 = vmul.f32 %v244, %v277
        %v301 = vmul.f32 %v246, %v277
        %v302 = vmul.f32 %v247, %v277
        %v303 = vmul.f32 %v249, %v277
        %v304 = vmul.f32 %v250, %v277
        %v305 = vmul.f32 %v252, %v277
        %v306 = vmul.f32 %v253, %v277
        %v307 = vmul.f32 %v255, %v277
        %v308 = vmul.f32 %v256, %v277
        %v309 = vmul.f32 %v258, %v277
        %v310 = vmul.f32 %v259, %v277
        %v312 = vperm.slane %v268, 0
        %v314 = vmul.f32 %v213, %v312
        %v315 = vmul.f32 %v214, %v312
        %v316 = vmul.f32 %v215, %v312
        %v317 = vmul.f32 %v216, %v312
        %v318 = vmul.f32 %v217, %v312
        %v319 = vmul.f32 %v218, %v312
        %v320 = vmul.f32 %v219, %v312
        %v321 = vmul.f32 %v220, %v312
        %v322 = vmul.f32 %v221, %v312
        %v323 = vmul.f32 %v222, %v312
        %v324 = vmul.f32 %v223, %v312
        %v325 = vmul.f32 %v224, %v312
        %v326 = vmul.f32 %v225, %v312
        %v327 = vmul.f32 %v226, %v312
        %v328 = vmul.f32 %v227, %v312
        %v329 = vmul.f32 %v228, %v312
        %v330 = vmul.f32 %v229, %v312
        %v331 = vmul.f32 %v230, %v312
        %v332 = vmul.f32 %v231, %v312
        %v333 = vmul.f32 %v232, %v312
        %v334 = vmul.f32 %v233, %v312
        %v335 = vmul.f32 %v234, %v312
        %v336 = vmul.f32 %v235, %v312
        %v337 = vmul.f32 %v236, %v312
        %v338 = vmul.f32 %v237, %v312
        %v339 = vmul.f32 %v238, %v312
        %v340 = vmul.f32 %v239, %v312
        %v341 = vmul.f32 %v240, %v312
        %v342 = vmul.f32 %v241, %v312
        %v343 = vmul.f32 %v242, %v312
        %v344 = vmul.f32 %v243, %v312
        %v345 = vmul.f32 %v244, %v312
        %v346 = vmul.f32 %v245, %v312
        %v347 = vmul.f32 %v246, %v312
        %v348 = vmul.f32 %v247, %v312
        %v349 = vmul.f32 %v248, %v312
        %v350 = vmul.f32 %v249, %v312
        %v351 = vmul.f32 %v250, %v312
        %v352 = vmul.f32 %v251, %v312
        %v353 = vmul.f32 %v252, %v312
        %v354 = vmul.f32 %v253, %v312
        %v355 = vmul.f32 %v254, %v312
        %v356 = vmul.f32 %v255, %v312
        %v357 = vmul.f32 %v256, %v312
        %v358 = vmul.f32 %v257, %v312
        %v359 = vmul.f32 %v258, %v312
        %v360 = vmul.f32 %v259, %v312
        %v361 = vmul.f32 %v260, %v312
        %vm410 = vcmask 1046528
        %v411 = vrot.slane %v314, 1
        %v412 = vrot.slane %v315, 1
        %v413 = vsel %vm410, %v411, %v412
        %v414 = vrot.slane %v316, 1
        %v415 = vsel %vm410, %v412, %v414
        %v416 = vrot.slane %v317, 1
        %v417 = vrot.slane %v318, 1
        %v418 = vsel %vm410, %v416, %v417
        %v419 = vrot.slane %v319, 1
        %v420 = vsel %vm410, %v417, %v419
        %v421 = vrot.slane %v320, 1
        %v422 = vrot.slane %v321, 1
        %v423 = vsel %vm410, %v421, %v422
        %v424 = vrot.slane %v322, 1
        %v425 = vsel %vm410, %v422, %v424
        %v426 = vrot.slane %v323, 1
        %v427 = vrot.slane %v324, 1
        %v428 = vsel %vm410, %v426, %v427
        %v429 = vrot.slane %v325, 1
        %v430 = vsel %vm410, %v427, %v429
        %v431 = vrot.slane %v326, 1
        %v432 = vrot.slane %v327, 1
        %v433 = vsel %vm410, %v431, %v432
        %v434 = vrot.slane %v328, 1
        %v435 = vsel %vm410, %v432, %v434
        %v436 = vrot.slane %v329, 1
        %v437 = vrot.slane %v330, 1
        %v438 = vsel %vm410, %v436, %v437
        %v439 = vrot.slane %v331, 1
        %v440 = vsel %vm410, %v437, %v439
        %v441 = vrot.slane %v332, 1
        %v442 = vrot.slane %v333, 1
        %v443 = vsel %vm410, %v441, %v442
        %v444 = vrot.slane %v334, 1
        %v445 = vsel %vm410, %v442, %v444
        %v446 = vrot.slane %v335, 1
        %v447 = vrot.slane %v336, 1
        %v448 = vsel %vm410, %v446, %v447
        %v449 = vrot.slane %v337, 1
        %v450 = vsel %vm410, %v447, %v449
        %v451 = vrot.slane %v338, 1
        %v452 = vrot.slane %v339, 1
        %v453 = vsel %vm410, %v451, %v452
        %v454 = vrot.slane %v340, 1
        %v455 = vsel %vm410, %v452, %v454
        %v456 = vrot.slane %v341, 1
        %v457 = vrot.slane %v342, 1
        %v458 = vsel %vm410, %v456, %v457
        %v459 = vrot.slane %v343, 1
        %v460 = vsel %vm410, %v457, %v459
        %v461 = vrot.slane %v344, 1
        %v462 = vrot.slane %v345, 1
        %v463 = vsel %vm410, %v461, %v462
        %v464 = vrot.slane %v346, 1
        %v465 = vsel %vm410, %v462, %v464
        %v466 = vrot.slane %v347, 1
        %v467 = vrot.slane %v348, 1
        %v468 = vsel %vm410, %v466, %v467
        %v469 = vrot.slane %v349, 1
        %v470 = vsel %vm410, %v467, %v469
        %v471 = vrot.slane %v350, 1
        %v472 = vrot.slane %v351, 1
        %v473 = vsel %vm410, %v471, %v472
        %v474 = vrot.slane %v352, 1
        %v475 = vsel %vm410, %v472, %v474
        %v476 = vrot.slane %v353, 1
        %v477 = vrot.slane %v354, 1
        %v478 = vsel %vm410, %v476, %v477
        %v479 = vrot.slane %v355, 1
        %v480 = vsel %vm410, %v477, %v479
        %v481 = vrot.slane %v356, 1
        %v482 = vrot.slane %v357, 1
        %v483 = vsel %vm410, %v481, %v482
        %v484 = vrot.slane %v358, 1
        %v485 = vsel %vm410, %v482, %v484
        %v486 = vrot.slane %v359, 1
        %v487 = vrot.slane %v360, 1
        %v488 = vsel %vm410, %v486, %v487
        %v489 = vrot.slane %v361, 1
        %v490 = vsel %vm410, %v487, %v489
        %v523 = vadd.f32 %v279, %v413
        %v524 = vadd.f32 %v280, %v415
        %v525 = vadd.f32 %v281, %v418
        %v526 = vadd.f32 %v282, %v420
        %v527 = vadd.f32 %v283, %v423
        %v528 = vadd.f32 %v284, %v425
        %v529 = vadd.f32 %v285, %v428
        %v530 = vadd.f32 %v286, %v430
        %v531 = vadd.f32 %v287, %v433
        %v532 = vadd.f32 %v288, %v435
        %v533 = vadd.f32 %v289, %v438
        %v534 = vadd.f32 %v290, %v440
        %v535 = vadd.f32 %v291, %v443
        %v536 = vadd.f32 %v292, %v445
        %v537 = vadd.f32 %v293, %v448
        %v538 = vadd.f32 %v294, %v450
        %v539 = vadd.f32 %v295, %v453
        %v540 = vadd.f32 %v296, %v455
        %v541 = vadd.f32 %v297, %v458
        %v542 = vadd.f32 %v298, %v460
        %v543 = vadd.f32 %v299, %v463
        %v544 = vadd.f32 %v300, %v465
        %v545 = vadd.f32 %v301, %v468
        %v546 = vadd.f32 %v302, %v470
        %v547 = vadd.f32 %v303, %v473
        %v548 = vadd.f32 %v304, %v475
        %v549 = vadd.f32 %v305, %v478
        %v550 = vadd.f32 %v306, %v480
        %v551 = vadd.f32 %v307, %v483
        %v552 = vadd.f32 %v308, %v485
        %v553 = vadd.f32 %v309, %v488
        %v554 = vadd.f32 %v310, %v490
        %v556 = vperm.slane %v269, 0
        %v558 = vmul.f32 %v213, %v556
        %v559 = vmul.f32 %v214, %v556
        %v560 = vmul.f32 %v215, %v556
        %v561 = vmul.f32 %v216, %v556
        %v562 = vmul.f32 %v217, %v556
        %v563 = vmul.f32 %v218, %v556
        %v564 = vmul.f32 %v219, %v556
        %v565 = vmul.f32 %v220, %v556
        %v566 = vmul.f32 %v221, %v556
        %v567 = vmul.f32 %v222, %v556
        %v568 = vmul.f32 %v223, %v556
        %v569 = vmul.f32 %v224, %v556
        %v570 = vmul.f32 %v225, %v556
        %v571 = vmul.f32 %v226, %v556
        %v572 = vmul.f32 %v227, %v556
        %v573 = vmul.f32 %v228, %v556
        %v574 = vmul.f32 %v229, %v556
        %v575 = vmul.f32 %v230, %v556
        %v576 = vmul.f32 %v231, %v556
        %v577 = vmul.f32 %v232, %v556
        %v578 = vmul.f32 %v233, %v556
        %v579 = vmul.f32 %v234, %v556
        %v580 = vmul.f32 %v235, %v556
        %v581 = vmul.f32 %v236, %v556
        %v582 = vmul.f32 %v237, %v556
        %v583 = vmul.f32 %v238, %v556
        %v584 = vmul.f32 %v239, %v556
        %v585 = vmul.f32 %v240, %v556
        %v586 = vmul.f32 %v241, %v556
        %v587 = vmul.f32 %v242, %v556
        %v588 = vmul.f32 %v243, %v556
        %v589 = vmul.f32 %v244, %v556
        %v590 = vmul.f32 %v245, %v556
        %v591 = vmul.f32 %v246, %v556
        %v592 = vmul.f32 %v247, %v556
        %v593 = vmul.f32 %v248, %v556
        %v594 = vmul.f32 %v249, %v556
        %v595 = vmul.f32 %v250, %v556
        %v596 = vmul.f32 %v251, %v556
        %v597 = vmul.f32 %v252, %v556
        %v598 = vmul.f32 %v253, %v556
        %v599 = vmul.f32 %v254, %v556
        %v600 = vmul.f32 %v255, %v556
        %v601 = vmul.f32 %v256, %v556
        %v602 = vmul.f32 %v257, %v556
        %v603 = vmul.f32 %v258, %v556
        %v604 = vmul.f32 %v259, %v556
        %v605 = vmul.f32 %v260, %v556
        %vm654 = vcmask 1045504
        %v655 = vrot.slane %v558, 2
        %v656 = vrot.slane %v559, 2
        %v657 = vsel %vm654, %v655, %v656
        %v658 = vrot.slane %v560, 2
        %v659 = vsel %vm654, %v656, %v658
        %v660 = vrot.slane %v561, 2
        %v661 = vrot.slane %v562, 2
        %v662 = vsel %vm654, %v660, %v661
        %v663 = vrot.slane %v563, 2
        %v664 = vsel %vm654, %v661, %v663
        %v665 = vrot.slane %v564, 2
        %v666 = vrot.slane %v565, 2
        %v667 = vsel %vm654, %v665, %v666
        %v668 = vrot.slane %v566, 2
        %v669 = vsel %vm654, %v666, %v668
        %v670 = vrot.slane %v567, 2
        %v671 = vrot.slane %v568, 2
        %v672 = vsel %vm654, %v670, %v671
        %v673 = vrot.slane %v569, 2
        %v674 = vsel %vm654, %v671, %v673
        %v675 = vrot.slane %v570, 2
        %v676 = vrot.slane %v571, 2
        %v677 = vsel %vm654, %v675, %v676
        %v678 = vrot.slane %v572, 2
        %v679 = vsel %vm654, %v676, %v678
        %v680 = vrot.slane %v573, 2
        %v681 = vrot.slane %v574, 2
        %v682 = vsel %vm654, %v680, %v681
        %v683 = vrot.slane %v575, 2
        %v684 = vsel %vm654, %v681, %v683
        %v685 = vrot.slane %v576, 2
        %v686 = vrot.slane %v577, 2
        %v687 = vsel %vm654, %v685, %v686
        %v688 = vrot.slane %v578, 2
        %v689 = vsel %vm654, %v686, %v688
        %v690 = vrot.slane %v579, 2
        %v691 = vrot.slane %v580, 2
        %v692 = vsel %vm654, %v690, %v691
        %v693 = vrot.slane %v581, 2
        %v694 = vsel %vm654, %v691, %v693
        %v695 = vrot.slane %v582, 2
        %v696 = vrot.slane %v583, 2
        %v697 = vsel %vm654, %v695, %v696
        %v698 = vrot.slane %v584, 2
        %v699 = vsel %vm654, %v696, %v698
        %v700 = vrot.slane %v585, 2
        %v701 = vrot.slane %v586, 2
        %v702 = vsel %vm654, %v700, %v701
        %v703 = vrot.slane %v587, 2
        %v704 = vsel %vm654, %v701, %v703
        %v705 = vrot.slane %v588, 2
        %v706 = vrot.slane %v589, 2
        %v707 = vsel %vm654, %v705, %v706
        %v708 = vrot.slane %v590, 2
        %v709 = vsel %vm654, %v706, %v708
        %v710 = vrot.slane %v591, 2
        %v711 = vrot.slane %v592, 2
        %v712 = vsel %vm654, %v710, %v711
        %v713 = vrot.slane %v593, 2
        %v714 = vsel %vm654, %v711, %v713
        %v715 = vrot.slane %v594, 2
        %v716 = vrot.slane %v595, 2
        %v717 = vsel %vm654, %v715, %v716
        %v718 = vrot.slane %v596, 2
        %v719 = vsel %vm654, %v716, %v718
        %v720 = vrot.slane %v597, 2
        %v721 = vrot.slane %v598, 2
        %v722 = vsel %vm654, %v720, %v721
        %v723 = vrot.slane %v599, 2
        %v724 = vsel %vm654, %v721, %v723
        %v725 = vrot.slane %v600, 2
        %v726 = vrot.slane %v601, 2
        %v727 = vsel %vm654, %v725, %v726
        %v728 = vrot.slane %v602, 2
        %v729 = vsel %vm654, %v726, %v728
        %v730 = vrot.slane %v603, 2
        %v731 = vrot.slane %v604, 2
        %v732 = vsel %vm654, %v730, %v731
        %v733 = vrot.slane %v605, 2
        %v734 = vsel %vm654, %v731, %v733
        %v767 = vadd.f32 %v523, %v657
        %v768 = vadd.f32 %v524, %v659
        %v769 = vadd.f32 %v525, %v662
        %v770 = vadd.f32 %v526, %v664
        %v771 = vadd.f32 %v527, %v667
        %v772 = vadd.f32 %v528, %v669
        %v773 = vadd.f32 %v529, %v672
        %v774 = vadd.f32 %v530, %v674
        %v775 = vadd.f32 %v531, %v677
        %v776 = vadd.f32 %v532, %v679
        %v777 = vadd.f32 %v533, %v682
        %v778 = vadd.f32 %v534, %v684
        %v779 = vadd.f32 %v535, %v687
        %v780 = vadd.f32 %v536, %v689
        %v781 = vadd.f32 %v537, %v692
        %v782 = vadd.f32 %v538, %v694
        %v783 = vadd.f32 %v539, %v697
        %v784 = vadd.f32 %v540, %v699
        %v785 = vadd.f32 %v541, %v702
        %v786 = vadd.f32 %v542, %v704
        %v787 = vadd.f32 %v543, %v707
        %v788 = vadd.f32 %v544, %v709
        %v789 = vadd.f32 %v545, %v712
        %v790 = vadd.f32 %v546, %v714
        %v791 = vadd.f32 %v547, %v717
        %v792 = vadd.f32 %v548, %v719
        %v793 = vadd.f32 %v549, %v722
        %v794 = vadd.f32 %v550, %v724
        %v795 = vadd.f32 %v551, %v727
        %v796 = vadd.f32 %v552, %v729
        %v797 = vadd.f32 %v553, %v732
        %v798 = vadd.f32 %v554, %v734
        %v800 = vperm.slane %v270, 0
        %v802 = vmul.f32 %v216, %v800
        %v803 = vmul.f32 %v217, %v800
        %v804 = vmul.f32 %v219, %v800
        %v805 = vmul.f32 %v220, %v800
        %v806 = vmul.f32 %v222, %v800
        %v807 = vmul.f32 %v223, %v800
        %v808 = vmul.f32 %v225, %v800
        %v809 = vmul.f32 %v226, %v800
        %v810 = vmul.f32 %v228, %v800
        %v811 = vmul.f32 %v229, %v800
        %v812 = vmul.f32 %v231, %v800
        %v813 = vmul.f32 %v232, %v800
        %v814 = vmul.f32 %v234, %v800
        %v815 = vmul.f32 %v235, %v800
        %v816 = vmul.f32 %v237, %v800
        %v817 = vmul.f32 %v238, %v800
        %v818 = vmul.f32 %v240, %v800
        %v819 = vmul.f32 %v241, %v800
        %v820 = vmul.f32 %v243, %v800
        %v821 = vmul.f32 %v244, %v800
        %v822 = vmul.f32 %v246, %v800
        %v823 = vmul.f32 %v247, %v800
        %v824 = vmul.f32 %v249, %v800
        %v825 = vmul.f32 %v250, %v800
        %v826 = vmul.f32 %v252, %v800
        %v827 = vmul.f32 %v253, %v800
        %v828 = vmul.f32 %v255, %v800
        %v829 = vmul.f32 %v256, %v800
        %v830 = vmul.f32 %v258, %v800
        %v831 = vmul.f32 %v259, %v800
        %v832 = vmul.f32 %v261, %v800
        %v833 = vmul.f32 %v262, %v800
        %v834 = vadd.f32 %v767, %v802
        %v835 = vadd.f32 %v768, %v803
        %v836 = vadd.f32 %v769, %v804
        %v837 = vadd.f32 %v770, %v805
        %v838 = vadd.f32 %v771, %v806
        %v839 = vadd.f32 %v772, %v807
        %v840 = vadd.f32 %v773, %v808
        %v841 = vadd.f32 %v774, %v809
        %v842 = vadd.f32 %v775, %v810
        %v843 = vadd.f32 %v776, %v811
        %v844 = vadd.f32 %v777, %v812
        %v845 = vadd.f32 %v778, %v813
        %v846 = vadd.f32 %v779, %v814
        %v847 = vadd.f32 %v780, %v815
        %v848 = vadd.f32 %v781, %v816
        %v849 = vadd.f32 %v782, %v817
        %v850 = vadd.f32 %v783, %v818
        %v851 = vadd.f32 %v784, %v819
        %v852 = vadd.f32 %v785, %v820
        %v853 = vadd.f32 %v786, %v821
        %v854 = vadd.f32 %v787, %v822
        %v855 = vadd.f32 %v788, %v823
        %v856 = vadd.f32 %v789, %v824
        %v857 = vadd.f32 %v790, %v825
        %v858 = vadd.f32 %v791, %v826
        %v859 = vadd.f32 %v792, %v827
        %v860 = vadd.f32 %v793, %v828
        %v861 = vadd.f32 %v794, %v829
        %v862 = vadd.f32 %v795, %v830
        %v863 = vadd.f32 %v796, %v831
        %v864 = vadd.f32 %v797, %v832
        %v865 = vadd.f32 %v798, %v833
        %v867 = vperm.slane %v271, 0
        %v869 = vmul.f32 %v216, %v867
        %v870 = vmul.f32 %v217, %v867
        %v871 = vmul.f32 %v218, %v867
        %v872 = vmul.f32 %v219, %v867
        %v873 = vmul.f32 %v220, %v867
        %v874 = vmul.f32 %v221, %v867
        %v875 = vmul.f32 %v222, %v867
        %v876 = vmul.f32 %v223, %v867
        %v877 = vmul.f32 %v224, %v867
        %v878 = vmul.f32 %v225, %v867
        %v879 = vmul.f32 %v226, %v867
        %v880 = vmul.f32 %v227, %v867
        %v881 = vmul.f32 %v228, %v867
        %v882 = vmul.f32 %v229, %v867
        %v883 = vmul.f32 %v230, %v867
        %v884 = vmul.f32 %v231, %v867
        %v885 = vmul.f32 %v232, %v867
        %v886 = vmul.f32 %v233, %v867
        %v887 = vmul.f32 %v234, %v867
        %v888 = vmul.f32 %v235, %v867
        %v889 = vmul.f32 %v236, %v867
        %v890 = vmul.f32 %v237, %v867
        %v891 = vmul.f32 %v238, %v867
        %v892 = vmul.f32 %v239, %v867
        %v893 = vmul.f32 %v240, %v867
        %v894 = vmul.f32 %v241, %v867
        %v895 = vmul.f32 %v242, %v867
        %v896 = vmul.f32 %v243, %v867
        %v897 = vmul.f32 %v244, %v867
        %v898 = vmul.f32 %v245, %v867
        %v899 = vmul.f32 %v246, %v867
        %v900 = vmul.f32 %v247, %v867
        %v901 = vmul.f32 %v248, %v867
        %v902 = vmul.f32 %v249, %v867
        %v903 = vmul.f32 %v250, %v867
        %v904 = vmul.f32 %v251, %v867
        %v905 = vmul.f32 %v252, %v867
        %v906 = vmul.f32 %v253, %v867
        %v907 = vmul.f32 %v254, %v867
        %v908 = vmul.f32 %v255, %v867
        %v909 = vmul.f32 %v256, %v867
        %v910 = vmul.f32 %v257, %v867
        %v911 = vmul.f32 %v258, %v867
        %v912 = vmul.f32 %v259, %v867
        %v913 = vmul.f32 %v260, %v867
        %v914 = vmul.f32 %v261, %v867
        %v915 = vmul.f32 %v262, %v867
        %v916 = vmul.f32 %v263, %v867
        %v965 = vrot.slane %v869, 1
        %v966 = vrot.slane %v870, 1
        %v967 = vsel %vm410, %v965, %v966
        %v968 = vrot.slane %v871, 1
        %v969 = vsel %vm410, %v966, %v968
        %v970 = vrot.slane %v872, 1
        %v971 = vrot.slane %v873, 1
        %v972 = vsel %vm410, %v970, %v971
        %v973 = vrot.slane %v874, 1
        %v974 = vsel %vm410, %v971, %v973
        %v975 = vrot.slane %v875, 1
        %v976 = vrot.slane %v876, 1
        %v977 = vsel %vm410, %v975, %v976
        %v978 = vrot.slane %v877, 1
        %v979 = vsel %vm410, %v976, %v978
        %v980 = vrot.slane %v878, 1
        %v981 = vrot.slane %v879, 1
        %v982 = vsel %vm410, %v980, %v981
        %v983 = vrot.slane %v880, 1
        %v984 = vsel %vm410, %v981, %v983
        %v985 = vrot.slane %v881, 1
        %v986 = vrot.slane %v882, 1
        %v987 = vsel %vm410, %v985, %v986
        %v988 = vrot.slane %v883, 1
        %v989 = vsel %vm410, %v986, %v988
        %v990 = vrot.slane %v884, 1
        %v991 = vrot.slane %v885, 1
        %v992 = vsel %vm410, %v990, %v991
        %v993 = vrot.slane %v886, 1
        %v994 = vsel %vm410, %v991, %v993
        %v995 = vrot.slane %v887, 1
        %v996 = vrot.slane %v888, 1
        %v997 = vsel %vm410, %v995, %v996
        %v998 = vrot.slane %v889, 1
        %v999 = vsel %vm410, %v996, %v998
        %v1000 = vrot.slane %v890, 1
        %v1001 = vrot.slane %v891, 1
        %v1002 = vsel %vm410, %v1000, %v1001
        %v1003 = vrot.slane %v892, 1
        %v1004 = vsel %vm410, %v1001, %v1003
        %v1005 = vrot.slane %v893, 1
        %v1006 = vrot.slane %v894, 1
        %v1007 = vsel %vm410, %v1005, %v1006
        %v1008 = vrot.slane %v895, 1
        %v1009 = vsel %vm410, %v1006, %v1008
        %v1010 = vrot.slane %v896, 1
        %v1011 = vrot.slane %v897, 1
        %v1012 = vsel %vm410, %v1010, %v1011
        %v1013 = vrot.slane %v898, 1
        %v1014 = vsel %vm410, %v1011, %v1013
        %v1015 = vrot.slane %v899, 1
        %v1016 = vrot.slane %v900, 1
        %v1017 = vsel %vm410, %v1015, %v1016
        %v1018 = vrot.slane %v901, 1
        %v1019 = vsel %vm410, %v1016, %v1018
        %v1020 = vrot.slane %v902, 1
        %v1021 = vrot.slane %v903, 1
        %v1022 = vsel %vm410, %v1020, %v1021
        %v1023 = vrot.slane %v904, 1
        %v1024 = vsel %vm410, %v1021, %v1023
        %v1025 = vrot.slane %v905, 1
        %v1026 = vrot.slane %v906, 1
        %v1027 = vsel %vm410, %v1025, %v1026
        %v1028 = vrot.slane %v907, 1
        %v1029 = vsel %vm410, %v1026, %v1028
        %v1030 = vrot.slane %v908, 1
        %v1031 = vrot.slane %v909, 1
        %v1032 = vsel %vm410, %v1030, %v1031
        %v1033 = vrot.slane %v910, 1
        %v1034 = vsel %vm410, %v1031, %v1033
        %v1035 = vrot.slane %v911, 1
        %v1036 = vrot.slane %v912, 1
        %v1037 = vsel %vm410, %v1035, %v1036
        %v1038 = vrot.slane %v913, 1
        %v1039 = vsel %vm410, %v1036, %v1038
        %v1040 = vrot.slane %v914, 1
        %v1041 = vrot.slane %v915, 1
        %v1042 = vsel %vm410, %v1040, %v1041
        %v1043 = vrot.slane %v916, 1
        %v1044 = vsel %vm410, %v1041, %v1043
        %v1077 = vadd.f32 %v834, %v967
        %v1078 = vadd.f32 %v835, %v969
        %v1079 = vadd.f32 %v836, %v972
        %v1080 = vadd.f32 %v837, %v974
        %v1081 = vadd.f32 %v838, %v977
        %v1082 = vadd.f32 %v839, %v979
        %v1083 = vadd.f32 %v840, %v982
        %v1084 = vadd.f32 %v841, %v984
        %v1085 = vadd.f32 %v842, %v987
        %v1086 = vadd.f32 %v843, %v989
        %v1087 = vadd.f32 %v844, %v992
        %v1088 = vadd.f32 %v845, %v994
        %v1089 = vadd.f32 %v846, %v997
        %v1090 = vadd.f32 %v847, %v999
        %v1091 = vadd.f32 %v848, %v1002
        %v1092 = vadd.f32 %v849, %v1004
        %v1093 = vadd.f32 %v850, %v1007
        %v1094 = vadd.f32 %v851, %v1009
        %v1095 = vadd.f32 %v852, %v1012
        %v1096 = vadd.f32 %v853, %v1014
        %v1097 = vadd.f32 %v854, %v1017
        %v1098 = vadd.f32 %v855, %v1019
        %v1099 = vadd.f32 %v856, %v1022
        %v1100 = vadd.f32 %v857, %v1024
        %v1101 = vadd.f32 %v858, %v1027
        %v1102 = vadd.f32 %v859, %v1029
        %v1103 = vadd.f32 %v860, %v1032
        %v1104 = vadd.f32 %v861, %v1034
        %v1105 = vadd.f32 %v862, %v1037
        %v1106 = vadd.f32 %v863, %v1039
        %v1107 = vadd.f32 %v864, %v1042
        %v1108 = vadd.f32 %v865, %v1044
        %v1110 = vperm.slane %v272, 0
        %v1112 = vmul.f32 %v216, %v1110
        %v1113 = vmul.f32 %v217, %v1110
        %v1114 = vmul.f32 %v218, %v1110
        %v1115 = vmul.f32 %v219, %v1110
        %v1116 = vmul.f32 %v220, %v1110
        %v1117 = vmul.f32 %v221, %v1110
        %v1118 = vmul.f32 %v222, %v1110
        %v1119 = vmul.f32 %v223, %v1110
        %v1120 = vmul.f32 %v224, %v1110
        %v1121 = vmul.f32 %v225, %v1110
        %v1122 = vmul.f32 %v226, %v1110
        %v1123 = vmul.f32 %v227, %v1110
        %v1124 = vmul.f32 %v228, %v1110
        %v1125 = vmul.f32 %v229, %v1110
        %v1126 = vmul.f32 %v230, %v1110
        %v1127 = vmul.f32 %v231, %v1110
        %v1128 = vmul.f32 %v232, %v1110
        %v1129 = vmul.f32 %v233, %v1110
        %v1130 = vmul.f32 %v234, %v1110
        %v1131 = vmul.f32 %v235, %v1110
        %v1132 = vmul.f32 %v236, %v1110
        %v1133 = vmul.f32 %v237, %v1110
        %v1134 = vmul.f32 %v238, %v1110
        %v1135 = vmul.f32 %v239, %v1110
        %v1136 = vmul.f32 %v240, %v1110
        %v1137 = vmul.f32 %v241, %v1110
        %v1138 = vmul.f32 %v242, %v1110
        %v1139 = vmul.f32 %v243, %v1110
        %v1140 = vmul.f32 %v244, %v1110
        %v1141 = vmul.f32 %v245, %v1110
        %v1142 = vmul.f32 %v246, %v1110
        %v1143 = vmul.f32 %v247, %v1110
        %v1144 = vmul.f32 %v248, %v1110
        %v1145 = vmul.f32 %v249, %v1110
        %v1146 = vmul.f32 %v250, %v1110
        %v1147 = vmul.f32 %v251, %v1110
        %v1148 = vmul.f32 %v252, %v1110
        %v1149 = vmul.f32 %v253, %v1110
        %v1150 = vmul.f32 %v254, %v1110
        %v1151 = vmul.f32 %v255, %v1110
        %v1152 = vmul.f32 %v256, %v1110
        %v1153 = vmul.f32 %v257, %v1110
        %v1154 = vmul.f32 %v258, %v1110
        %v1155 = vmul.f32 %v259, %v1110
        %v1156 = vmul.f32 %v260, %v1110
        %v1157 = vmul.f32 %v261, %v1110
        %v1158 = vmul.f32 %v262, %v1110
        %v1159 = vmul.f32 %v263, %v1110
        %v1208 = vrot.slane %v1112, 2
        %v1209 = vrot.slane %v1113, 2
        %v1210 = vsel %vm654, %v1208, %v1209
        %v1211 = vrot.slane %v1114, 2
        %v1212 = vsel %vm654, %v1209, %v1211
        %v1213 = vrot.slane %v1115, 2
        %v1214 = vrot.slane %v1116, 2
        %v1215 = vsel %vm654, %v1213, %v1214
        %v1216 = vrot.slane %v1117, 2
        %v1217 = vsel %vm654, %v1214, %v1216
        %v1218 = vrot.slane %v1118, 2
        %v1219 = vrot.slane %v1119, 2
        %v1220 = vsel %vm654, %v1218, %v1219
        %v1221 = vrot.slane %v1120, 2
        %v1222 = vsel %vm654, %v1219, %v1221
        %v1223 = vrot.slane %v1121, 2
        %v1224 = vrot.slane %v1122, 2
        %v1225 = vsel %vm654, %v1223, %v1224
        %v1226 = vrot.slane %v1123, 2
        %v1227 = vsel %vm654, %v1224, %v1226
        %v1228 = vrot.slane %v1124, 2
        %v1229 = vrot.slane %v1125, 2
        %v1230 = vsel %vm654, %v1228, %v1229
        %v1231 = vrot.slane %v1126, 2
        %v1232 = vsel %vm654, %v1229, %v1231
        %v1233 = vrot.slane %v1127, 2
        %v1234 = vrot.slane %v1128, 2
        %v1235 = vsel %vm654, %v1233, %v1234
        %v1236 = vrot.slane %v1129, 2
        %v1237 = vsel %vm654, %v1234, %v1236
        %v1238 = vrot.slane %v1130, 2
        %v1239 = vrot.slane %v1131, 2
        %v1240 = vsel %vm654, %v1238, %v1239
        %v1241 = vrot.slane %v1132, 2
        %v1242 = vsel %vm654, %v1239, %v1241
        %v1243 = vrot.slane %v1133, 2
        %v1244 = vrot.slane %v1134, 2
        %v1245 = vsel %vm654, %v1243, %v1244
        %v1246 = vrot.slane %v1135, 2
        %v1247 = vsel %vm654, %v1244, %v1246
        %v1248 = vrot.slane %v1136, 2
        %v1249 = vrot.slane %v1137, 2
        %v1250 = vsel %vm654, %v1248, %v1249
        %v1251 = vrot.slane %v1138, 2
        %v1252 = vsel %vm654, %v1249, %v1251
        %v1253 = vrot.slane %v1139, 2
        %v1254 = vrot.slane %v1140, 2
        %v1255 = vsel %vm654, %v1253, %v1254
        %v1256 = vrot.slane %v1141, 2
        %v1257 = vsel %vm654, %v1254, %v1256
        %v1258 = vrot.slane %v1142, 2
        %v1259 = vrot.slane %v1143, 2
        %v1260 = vsel %vm654, %v1258, %v1259
        %v1261 = vrot.slane %v1144, 2
        %v1262 = vsel %vm654, %v1259, %v1261
        %v1263 = vrot.slane %v1145, 2
        %v1264 = vrot.slane %v1146, 2
        %v1265 = vsel %vm654, %v1263, %v1264
        %v1266 = vrot.slane %v1147, 2
        %v1267 = vsel %vm654, %v1264, %v1266
        %v1268 = vrot.slane %v1148, 2
        %v1269 = vrot.slane %v1149, 2
        %v1270 = vsel %vm654, %v1268, %v1269
        %v1271 = vrot.slane %v1150, 2
        %v1272 = vsel %vm654, %v1269, %v1271
        %v1273 = vrot.slane %v1151, 2
        %v1274 = vrot.slane %v1152, 2
        %v1275 = vsel %vm654, %v1273, %v1274
        %v1276 = vrot.slane %v1153, 2
        %v1277 = vsel %vm654, %v1274, %v1276
        %v1278 = vrot.slane %v1154, 2
        %v1279 = vrot.slane %v1155, 2
        %v1280 = vsel %vm654, %v1278, %v1279
        %v1281 = vrot.slane %v1156, 2
        %v1282 = vsel %vm654, %v1279, %v1281
        %v1283 = vrot.slane %v1157, 2
        %v1284 = vrot.slane %v1158, 2
        %v1285 = vsel %vm654, %v1283, %v1284
        %v1286 = vrot.slane %v1159, 2
        %v1287 = vsel %vm654, %v1284, %v1286
        %v1320 = vadd.f32 %v1077, %v1210
        %v1321 = vadd.f32 %v1078, %v1212
        %v1322 = vadd.f32 %v1079, %v1215
        %v1323 = vadd.f32 %v1080, %v1217
        %v1324 = vadd.f32 %v1081, %v1220
        %v1325 = vadd.f32 %v1082, %v1222
        %v1326 = vadd.f32 %v1083, %v1225
        %v1327 = vadd.f32 %v1084, %v1227
        %v1328 = vadd.f32 %v1085, %v1230
        %v1329 = vadd.f32 %v1086, %v1232
        %v1330 = vadd.f32 %v1087, %v1235
        %v1331 = vadd.f32 %v1088, %v1237
        %v1332 = vadd.f32 %v1089, %v1240
        %v1333 = vadd.f32 %v1090, %v1242
        %v1334 = vadd.f32 %v1091, %v1245
        %v1335 = vadd.f32 %v1092, %v1247
        %v1336 = vadd.f32 %v1093, %v1250
        %v1337 = vadd.f32 %v1094, %v1252
        %v1338 = vadd.f32 %v1095, %v1255
        %v1339 = vadd.f32 %v1096, %v1257
        %v1340 = vadd.f32 %v1097, %v1260
        %v1341 = vadd.f32 %v1098, %v1262
        %v1342 = vadd.f32 %v1099, %v1265
        %v1343 = vadd.f32 %v1100, %v1267
        %v1344 = vadd.f32 %v1101, %v1270
        %v1345 = vadd.f32 %v1102, %v1272
        %v1346 = vadd.f32 %v1103, %v1275
        %v1347 = vadd.f32 %v1104, %v1277
        %v1348 = vadd.f32 %v1105, %v1280
        %v1349 = vadd.f32 %v1106, %v1282
        %v1350 = vadd.f32 %v1107, %v1285
        %v1351 = vadd.f32 %v1108, %v1287
        %v1353 = vperm.slane %v273, 0
        %v1355 = vmul.f32 %v219, %v1353
        %v1356 = vmul.f32 %v220, %v1353
        %v1357 = vmul.f32 %v222, %v1353
        %v1358 = vmul.f32 %v223, %v1353
        %v1359 = vmul.f32 %v225, %v1353
        %v1360 = vmul.f32 %v226, %v1353
        %v1361 = vmul.f32 %v228, %v1353
        %v1362 = vmul.f32 %v229, %v1353
        %v1363 = vmul.f32 %v231, %v1353
        %v1364 = vmul.f32 %v232, %v1353
        %v1365 = vmul.f32 %v234, %v1353
        %v1366 = vmul.f32 %v235, %v1353
        %v1367 = vmul.f32 %v237, %v1353
        %v1368 = vmul.f32 %v238, %v1353
        %v1369 = vmul.f32 %v240, %v1353
        %v1370 = vmul.f32 %v241, %v1353
        %v1371 = vmul.f32 %v243, %v1353
        %v1372 = vmul.f32 %v244, %v1353
        %v1373 = vmul.f32 %v246, %v1353
        %v1374 = vmul.f32 %v247, %v1353
        %v1375 = vmul.f32 %v249, %v1353
        %v1376 = vmul.f32 %v250, %v1353
        %v1377 = vmul.f32 %v252, %v1353
        %v1378 = vmul.f32 %v253, %v1353
        %v1379 = vmul.f32 %v255, %v1353
        %v1380 = vmul.f32 %v256, %v1353
        %v1381 = vmul.f32 %v258, %v1353
        %v1382 = vmul.f32 %v259, %v1353
        %v1383 = vmul.f32 %v261, %v1353
        %v1384 = vmul.f32 %v262, %v1353
        %v1385 = vmul.f32 %v264, %v1353
        %v1386 = vmul.f32 %v265, %v1353
        %v1387 = vadd.f32 %v1320, %v1355
        %v1388 = vadd.f32 %v1321, %v1356
        %v1389 = vadd.f32 %v1322, %v1357
        %v1390 = vadd.f32 %v1323, %v1358
        %v1391 = vadd.f32 %v1324, %v1359
        %v1392 = vadd.f32 %v1325, %v1360
        %v1393 = vadd.f32 %v1326, %v1361
        %v1394 = vadd.f32 %v1327, %v1362
        %v1395 = vadd.f32 %v1328, %v1363
        %v1396 = vadd.f32 %v1329, %v1364
        %v1397 = vadd.f32 %v1330, %v1365
        %v1398 = vadd.f32 %v1331, %v1366
        %v1399 = vadd.f32 %v1332, %v1367
        %v1400 = vadd.f32 %v1333, %v1368
        %v1401 = vadd.f32 %v1334, %v1369
        %v1402 = vadd.f32 %v1335, %v1370
        %v1403 = vadd.f32 %v1336, %v1371
        %v1404 = vadd.f32 %v1337, %v1372
        %v1405 = vadd.f32 %v1338, %v1373
        %v1406 = vadd.f32 %v1339, %v1374
        %v1407 = vadd.f32 %v1340, %v1375
        %v1408 = vadd.f32 %v1341, %v1376
        %v1409 = vadd.f32 %v1342, %v1377
        %v1410 = vadd.f32 %v1343, %v1378
        %v1411 = vadd.f32 %v1344, %v1379
        %v1412 = vadd.f32 %v1345, %v1380
        %v1413 = vadd.f32 %v1346, %v1381
        %v1414 = vadd.f32 %v1347, %v1382
        %v1415 = vadd.f32 %v1348, %v1383
        %v1416 = vadd.f32 %v1349, %v1384
        %v1417 = vadd.f32 %v1350, %v1385
        %v1418 = vadd.f32 %v1351, %v1386
        %v1420 = vperm.slane %v274, 0
        %v1422 = vmul.f32 %v219, %v1420
        %v1423 = vmul.f32 %v220, %v1420
        %v1424 = vmul.f32 %v221, %v1420
        %v1425 = vmul.f32 %v222, %v1420
        %v1426 = vmul.f32 %v223, %v1420
        %v1427 = vmul.f32 %v224, %v1420
        %v1428 = vmul.f32 %v225, %v1420
        %v1429 = vmul.f32 %v226, %v1420
        %v1430 = vmul.f32 %v227, %v1420
        %v1431 = vmul.f32 %v228, %v1420
        %v1432 = vmul.f32 %v229, %v1420
        %v1433 = vmul.f32 %v230, %v1420
        %v1434 = vmul.f32 %v231, %v1420
        %v1435 = vmul.f32 %v232, %v1420
        %v1436 = vmul.f32 %v233, %v1420
        %v1437 = vmul.f32 %v234, %v1420
        %v1438 = vmul.f32 %v235, %v1420
        %v1439 = vmul.f32 %v236, %v1420
        %v1440 = vmul.f32 %v237, %v1420
        %v1441 = vmul.f32 %v238, %v1420
        %v1442 = vmul.f32 %v239, %v1420
        %v1443 = vmul.f32 %v240, %v1420
        %v1444 = vmul.f32 %v241, %v1420
        %v1445 = vmul.f32 %v242, %v1420
        %v1446 = vmul.f32 %v243, %v1420
        %v1447 = vmul.f32 %v244, %v1420
        %v1448 = vmul.f32 %v245, %v1420
        %v1449 = vmul.f32 %v246, %v1420
        %v1450 = vmul.f32 %v247, %v1420
        %v1451 = vmul.f32 %v248, %v1420
        %v1452 = vmul.f32 %v249, %v1420
        %v1453 = vmul.f32 %v250, %v1420
        %v1454 = vmul.f32 %v251, %v1420
        %v1455 = vmul.f32 %v252, %v1420
        %v1456 = vmul.f32 %v253, %v1420
        %v1457 = vmul.f32 %v254, %v1420
        %v1458 = vmul.f32 %v255, %v1420
        %v1459 = vmul.f32 %v256, %v1420
        %v1460 = vmul.f32 %v257, %v1420
        %v1461 = vmul.f32 %v258, %v1420
        %v1462 = vmul.f32 %v259, %v1420
        %v1463 = vmul.f32 %v260, %v1420
        %v1464 = vmul.f32 %v261, %v1420
        %v1465 = vmul.f32 %v262, %v1420
        %v1466 = vmul.f32 %v263, %v1420
        %v1467 = vmul.f32 %v264, %v1420
        %v1468 = vmul.f32 %v265, %v1420
        %v1469 = vmul.f32 %v266, %v1420
        %v1518 = vrot.slane %v1422, 1
        %v1519 = vrot.slane %v1423, 1
        %v1520 = vsel %vm410, %v1518, %v1519
        %v1521 = vrot.slane %v1424, 1
        %v1522 = vsel %vm410, %v1519, %v1521
        %v1523 = vrot.slane %v1425, 1
        %v1524 = vrot.slane %v1426, 1
        %v1525 = vsel %vm410, %v1523, %v1524
        %v1526 = vrot.slane %v1427, 1
        %v1527 = vsel %vm410, %v1524, %v1526
        %v1528 = vrot.slane %v1428, 1
        %v1529 = vrot.slane %v1429, 1
        %v1530 = vsel %vm410, %v1528, %v1529
        %v1531 = vrot.slane %v1430, 1
        %v1532 = vsel %vm410, %v1529, %v1531
        %v1533 = vrot.slane %v1431, 1
        %v1534 = vrot.slane %v1432, 1
        %v1535 = vsel %vm410, %v1533, %v1534
        %v1536 = vrot.slane %v1433, 1
        %v1537 = vsel %vm410, %v1534, %v1536
        %v1538 = vrot.slane %v1434, 1
        %v1539 = vrot.slane %v1435, 1
        %v1540 = vsel %vm410, %v1538, %v1539
        %v1541 = vrot.slane %v1436, 1
        %v1542 = vsel %vm410, %v1539, %v1541
        %v1543 = vrot.slane %v1437, 1
        %v1544 = vrot.slane %v1438, 1
        %v1545 = vsel %vm410, %v1543, %v1544
        %v1546 = vrot.slane %v1439, 1
        %v1547 = vsel %vm410, %v1544, %v1546
        %v1548 = vrot.slane %v1440, 1
        %v1549 = vrot.slane %v1441, 1
        %v1550 = vsel %vm410, %v1548, %v1549
        %v1551 = vrot.slane %v1442, 1
        %v1552 = vsel %vm410, %v1549, %v1551
        %v1553 = vrot.slane %v1443, 1
        %v1554 = vrot.slane %v1444, 1
        %v1555 = vsel %vm410, %v1553, %v1554
        %v1556 = vrot.slane %v1445, 1
        %v1557 = vsel %vm410, %v1554, %v1556
        %v1558 = vrot.slane %v1446, 1
        %v1559 = vrot.slane %v1447, 1
        %v1560 = vsel %vm410, %v1558, %v1559
        %v1561 = vrot.slane %v1448, 1
        %v1562 = vsel %vm410, %v1559, %v1561
        %v1563 = vrot.slane %v1449, 1
        %v1564 = vrot.slane %v1450, 1
        %v1565 = vsel %vm410, %v1563, %v1564
        %v1566 = vrot.slane %v1451, 1
        %v1567 = vsel %vm410, %v1564, %v1566
        %v1568 = vrot.slane %v1452, 1
        %v1569 = vrot.slane %v1453, 1
        %v1570 = vsel %vm410, %v1568, %v1569
        %v1571 = vrot.slane %v1454, 1
        %v1572 = vsel %vm410, %v1569, %v1571
        %v1573 = vrot.slane %v1455, 1
        %v1574 = vrot.slane %v1456, 1
        %v1575 = vsel %vm410, %v1573, %v1574
        %v1576 = vrot.slane %v1457, 1
        %v1577 = vsel %vm410, %v1574, %v1576
        %v1578 = vrot.slane %v1458, 1
        %v1579 = vrot.slane %v1459, 1
        %v1580 = vsel %vm410, %v1578, %v1579
        %v1581 = vrot.slane %v1460, 1
        %v1582 = vsel %vm410, %v1579, %v1581
        %v1583 = vrot.slane %v1461, 1
        %v1584 = vrot.slane %v1462, 1
        %v1585 = vsel %vm410, %v1583, %v1584
        %v1586 = vrot.slane %v1463, 1
        %v1587 = vsel %vm410, %v1584, %v1586
        %v1588 = vrot.slane %v1464, 1
        %v1589 = vrot.slane %v1465, 1
        %v1590 = vsel %vm410, %v1588, %v1589
        %v1591 = vrot.slane %v1466, 1
        %v1592 = vsel %vm410, %v1589, %v1591
        %v1593 = vrot.slane %v1467, 1
        %v1594 = vrot.slane %v1468, 1
        %v1595 = vsel %vm410, %v1593, %v1594
        %v1596 = vrot.slane %v1469, 1
        %v1597 = vsel %vm410, %v1594, %v1596
        %v1630 = vadd.f32 %v1387, %v1520
        %v1631 = vadd.f32 %v1388, %v1522
        %v1632 = vadd.f32 %v1389, %v1525
        %v1633 = vadd.f32 %v1390, %v1527
        %v1634 = vadd.f32 %v1391, %v1530
        %v1635 = vadd.f32 %v1392, %v1532
        %v1636 = vadd.f32 %v1393, %v1535
        %v1637 = vadd.f32 %v1394, %v1537
        %v1638 = vadd.f32 %v1395, %v1540
        %v1639 = vadd.f32 %v1396, %v1542
        %v1640 = vadd.f32 %v1397, %v1545
        %v1641 = vadd.f32 %v1398, %v1547
        %v1642 = vadd.f32 %v1399, %v1550
        %v1643 = vadd.f32 %v1400, %v1552
        %v1644 = vadd.f32 %v1401, %v1555
        %v1645 = vadd.f32 %v1402, %v1557
        %v1646 = vadd.f32 %v1403, %v1560
        %v1647 = vadd.f32 %v1404, %v1562
        %v1648 = vadd.f32 %v1405, %v1565
        %v1649 = vadd.f32 %v1406, %v1567
        %v1650 = vadd.f32 %v1407, %v1570
        %v1651 = vadd.f32 %v1408, %v1572
        %v1652 = vadd.f32 %v1409, %v1575
        %v1653 = vadd.f32 %v1410, %v1577
        %v1654 = vadd.f32 %v1411, %v1580
        %v1655 = vadd.f32 %v1412, %v1582
        %v1656 = vadd.f32 %v1413, %v1585
        %v1657 = vadd.f32 %v1414, %v1587
        %v1658 = vadd.f32 %v1415, %v1590
        %v1659 = vadd.f32 %v1416, %v1592
        %v1660 = vadd.f32 %v1417, %v1595
        %v1661 = vadd.f32 %v1418, %v1597
        %v1663 = vperm.slane %v275, 0
        %v1665 = vmul.f32 %v219, %v1663
        %v1666 = vmul.f32 %v220, %v1663
        %v1667 = vmul.f32 %v221, %v1663
        %v1668 = vmul.f32 %v222, %v1663
        %v1669 = vmul.f32 %v223, %v1663
        %v1670 = vmul.f32 %v224, %v1663
        %v1671 = vmul.f32 %v225, %v1663
        %v1672 = vmul.f32 %v226, %v1663
        %v1673 = vmul.f32 %v227, %v1663
        %v1674 = vmul.f32 %v228, %v1663
        %v1675 = vmul.f32 %v229, %v1663
        %v1676 = vmul.f32 %v230, %v1663
        %v1677 = vmul.f32 %v231, %v1663
        %v1678 = vmul.f32 %v232, %v1663
        %v1679 = vmul.f32 %v233, %v1663
        %v1680 = vmul.f32 %v234, %v1663
        %v1681 = vmul.f32 %v235, %v1663
        %v1682 = vmul.f32 %v236, %v1663
        %v1683 = vmul.f32 %v237, %v1663
        %v1684 = vmul.f32 %v238, %v1663
        %v1685 = vmul.f32 %v239, %v1663
        %v1686 = vmul.f32 %v240, %v1663
        %v1687 = vmul.f32 %v241, %v1663
        %v1688 = vmul.f32 %v242, %v1663
        %v1689 = vmul.f32 %v243, %v1663
        %v1690 = vmul.f32 %v244, %v1663
        %v1691 = vmul.f32 %v245, %v1663
        %v1692 = vmul.f32 %v246, %v1663
        %v1693 = vmul.f32 %v247, %v1663
        %v1694 = vmul.f32 %v248, %v1663
        %v1695 = vmul.f32 %v249, %v1663
        %v1696 = vmul.f32 %v250, %v1663
        %v1697 = vmul.f32 %v251, %v1663
        %v1698 = vmul.f32 %v252, %v1663
        %v1699 = vmul.f32 %v253, %v1663
        %v1700 = vmul.f32 %v254, %v1663
        %v1701 = vmul.f32 %v255, %v1663
        %v1702 = vmul.f32 %v256, %v1663
        %v1703 = vmul.f32 %v257, %v1663
        %v1704 = vmul.f32 %v258, %v1663
        %v1705 = vmul.f32 %v259, %v1663
        %v1706 = vmul.f32 %v260, %v1663
        %v1707 = vmul.f32 %v261, %v1663
        %v1708 = vmul.f32 %v262, %v1663
        %v1709 = vmul.f32 %v263, %v1663
        %v1710 = vmul.f32 %v264, %v1663
        %v1711 = vmul.f32 %v265, %v1663
        %v1712 = vmul.f32 %v266, %v1663
        %v1761 = vrot.slane %v1665, 2
        %v1762 = vrot.slane %v1666, 2
        %v1763 = vsel %vm654, %v1761, %v1762
        %v1764 = vrot.slane %v1667, 2
        %v1765 = vsel %vm654, %v1762, %v1764
        %v1766 = vrot.slane %v1668, 2
        %v1767 = vrot.slane %v1669, 2
        %v1768 = vsel %vm654, %v1766, %v1767
        %v1769 = vrot.slane %v1670, 2
        %v1770 = vsel %vm654, %v1767, %v1769
        %v1771 = vrot.slane %v1671, 2
        %v1772 = vrot.slane %v1672, 2
        %v1773 = vsel %vm654, %v1771, %v1772
        %v1774 = vrot.slane %v1673, 2
        %v1775 = vsel %vm654, %v1772, %v1774
        %v1776 = vrot.slane %v1674, 2
        %v1777 = vrot.slane %v1675, 2
        %v1778 = vsel %vm654, %v1776, %v1777
        %v1779 = vrot.slane %v1676, 2
        %v1780 = vsel %vm654, %v1777, %v1779
        %v1781 = vrot.slane %v1677, 2
        %v1782 = vrot.slane %v1678, 2
        %v1783 = vsel %vm654, %v1781, %v1782
        %v1784 = vrot.slane %v1679, 2
        %v1785 = vsel %vm654, %v1782, %v1784
        %v1786 = vrot.slane %v1680, 2
        %v1787 = vrot.slane %v1681, 2
        %v1788 = vsel %vm654, %v1786, %v1787
        %v1789 = vrot.slane %v1682, 2
        %v1790 = vsel %vm654, %v1787, %v1789
        %v1791 = vrot.slane %v1683, 2
        %v1792 = vrot.slane %v1684, 2
        %v1793 = vsel %vm654, %v1791, %v1792
        %v1794 = vrot.slane %v1685, 2
        %v1795 = vsel %vm654, %v1792, %v1794
        %v1796 = vrot.slane %v1686, 2
        %v1797 = vrot.slane %v1687, 2
        %v1798 = vsel %vm654, %v1796, %v1797
        %v1799 = vrot.slane %v1688, 2
        %v1800 = vsel %vm654, %v1797, %v1799
        %v1801 = vrot.slane %v1689, 2
        %v1802 = vrot.slane %v1690, 2
        %v1803 = vsel %vm654, %v1801, %v1802
        %v1804 = vrot.slane %v1691, 2
        %v1805 = vsel %vm654, %v1802, %v1804
        %v1806 = vrot.slane %v1692, 2
        %v1807 = vrot.slane %v1693, 2
        %v1808 = vsel %vm654, %v1806, %v1807
        %v1809 = vrot.slane %v1694, 2
        %v1810 = vsel %vm654, %v1807, %v1809
        %v1811 = vrot.slane %v1695, 2
        %v1812 = vrot.slane %v1696, 2
        %v1813 = vsel %vm654, %v1811, %v1812
        %v1814 = vrot.slane %v1697, 2
        %v1815 = vsel %vm654, %v1812, %v1814
        %v1816 = vrot.slane %v1698, 2
        %v1817 = vrot.slane %v1699, 2
        %v1818 = vsel %vm654, %v1816, %v1817
        %v1819 = vrot.slane %v1700, 2
        %v1820 = vsel %vm654, %v1817, %v1819
        %v1821 = vrot.slane %v1701, 2
        %v1822 = vrot.slane %v1702, 2
        %v1823 = vsel %vm654, %v1821, %v1822
        %v1824 = vrot.slane %v1703, 2
        %v1825 = vsel %vm654, %v1822, %v1824
        %v1826 = vrot.slane %v1704, 2
        %v1827 = vrot.slane %v1705, 2
        %v1828 = vsel %vm654, %v1826, %v1827
        %v1829 = vrot.slane %v1706, 2
        %v1830 = vsel %vm654, %v1827, %v1829
        %v1831 = vrot.slane %v1707, 2
        %v1832 = vrot.slane %v1708, 2
        %v1833 = vsel %vm654, %v1831, %v1832
        %v1834 = vrot.slane %v1709, 2
        %v1835 = vsel %vm654, %v1832, %v1834
        %v1836 = vrot.slane %v1710, 2
        %v1837 = vrot.slane %v1711, 2
        %v1838 = vsel %vm654, %v1836, %v1837
        %v1839 = vrot.slane %v1712, 2
        %v1840 = vsel %vm654, %v1837, %v1839
        %v1873 = vadd.f32 %v1630, %v1763
        %v1874 = vadd.f32 %v1631, %v1765
        %v1875 = vadd.f32 %v1632, %v1768
        %v1876 = vadd.f32 %v1633, %v1770
        %v1877 = vadd.f32 %v1634, %v1773
        %v1878 = vadd.f32 %v1635, %v1775
        %v1879 = vadd.f32 %v1636, %v1778
        %v1880 = vadd.f32 %v1637, %v1780
        %v1881 = vadd.f32 %v1638, %v1783
        %v1882 = vadd.f32 %v1639, %v1785
        %v1883 = vadd.f32 %v1640, %v1788
        %v1884 = vadd.f32 %v1641, %v1790
        %v1885 = vadd.f32 %v1642, %v1793
        %v1886 = vadd.f32 %v1643, %v1795
        %v1887 = vadd.f32 %v1644, %v1798
        %v1888 = vadd.f32 %v1645, %v1800
        %v1889 = vadd.f32 %v1646, %v1803
        %v1890 = vadd.f32 %v1647, %v1805
        %v1891 = vadd.f32 %v1648, %v1808
        %v1892 = vadd.f32 %v1649, %v1810
        %v1893 = vadd.f32 %v1650, %v1813
        %v1894 = vadd.f32 %v1651, %v1815
        %v1895 = vadd.f32 %v1652, %v1818
        %v1896 = vadd.f32 %v1653, %v1820
        %v1897 = vadd.f32 %v1654, %v1823
        %v1898 = vadd.f32 %v1655, %v1825
        %v1899 = vadd.f32 %v1656, %v1828
        %v1900 = vadd.f32 %v1657, %v1830
        %v1901 = vadd.f32 %v1658, %v1833
        %v1902 = vadd.f32 %v1659, %v1835
        %v1903 = vadd.f32 %v1660, %v1838
        %v1904 = vadd.f32 %v1661, %v1840
        %v1905 = vpack.c.bf16 %v1873, %v1873
        %v1906 = vpack.c.bf16 %v1874, %v1874
        %v1907 = vpack.c.bf16 %v1875, %v1875
        %v1908 = vpack.c.bf16 %v1876, %v1876
        %v1909 = vpack.c.bf16 %v1877, %v1877
        %v1910 = vpack.c.bf16 %v1878, %v1878
        %v1911 = vpack.c.bf16 %v1879, %v1879
        %v1912 = vpack.c.bf16 %v1880, %v1880
        %v1913 = vpack.c.bf16 %v1881, %v1881
        %v1914 = vpack.c.bf16 %v1882, %v1882
        %v1915 = vpack.c.bf16 %v1883, %v1883
        %v1916 = vpack.c.bf16 %v1884, %v1884
        %v1917 = vpack.c.bf16 %v1885, %v1885
        %v1918 = vpack.c.bf16 %v1886, %v1886
        %v1919 = vpack.c.bf16 %v1887, %v1887
        %v1920 = vpack.c.bf16 %v1888, %v1888
        %v1921 = vpack.c.bf16 %v1889, %v1889
        %v1922 = vpack.c.bf16 %v1890, %v1890
        %v1923 = vpack.c.bf16 %v1891, %v1891
        %v1924 = vpack.c.bf16 %v1892, %v1892
        %v1925 = vpack.c.bf16 %v1893, %v1893
        %v1926 = vpack.c.bf16 %v1894, %v1894
        %v1927 = vpack.c.bf16 %v1895, %v1895
        %v1928 = vpack.c.bf16 %v1896, %v1896
        %v1929 = vpack.c.bf16 %v1897, %v1897
        %v1930 = vpack.c.bf16 %v1898, %v1898
        %v1931 = vpack.c.bf16 %v1899, %v1899
        %v1932 = vpack.c.bf16 %v1900, %v1900
        %v1933 = vpack.c.bf16 %v1901, %v1901
        %v1934 = vpack.c.bf16 %v1902, %v1902
        %v1935 = vpack.c.bf16 %v1903, %v1903
        %v1936 = vpack.c.bf16 %v1904, %v1904
        %vm1937 = vcmask 257024
        %1938 = vst.msk [vmem:[#allocation2] sm:$0xf] %vm1937, %v1905
        %1939 = vst.msk [vmem:[#allocation2 + $0x4] sm:$0xf] %vm1937, %v1906
        %1940 = vst.msk [vmem:[#allocation2 + $0x8] sm:$0xf] %vm1937, %v1907
        %1941 = vst.msk [vmem:[#allocation2 + $0xc] sm:$0xf] %vm1937, %v1908
        %1942 = vst.msk [vmem:[#allocation2 + $0x10] sm:$0xf] %vm1937, %v1909
        %1943 = vst.msk [vmem:[#allocation2 + $0x14] sm:$0xf] %vm1937, %v1910
        %1944 = vst.msk [vmem:[#allocation2 + $0x18] sm:$0xf] %vm1937, %v1911
        %1945 = vst.msk [vmem:[#allocation2 + $0x1c] sm:$0xf] %vm1937, %v1912
        %1946 = vst.msk [vmem:[#allocation2 + $0x20] sm:$0xf] %vm1937, %v1913
        %1947 = vst.msk [vmem:[#allocation2 + $0x24] sm:$0xf] %vm1937, %v1914
        %1948 = vst.msk [vmem:[#allocation2 + $0x28] sm:$0xf] %vm1937, %v1915
        %1949 = vst.msk [vmem:[#allocation2 + $0x2c] sm:$0xf] %vm1937, %v1916
        %1950 = vst.msk [vmem:[#allocation2 + $0x30] sm:$0xf] %vm1937, %v1917
        %1951 = vst.msk [vmem:[#allocation2 + $0x34] sm:$0xf] %vm1937, %v1918
        %1952 = vst.msk [vmem:[#allocation2 + $0x38] sm:$0xf] %vm1937, %v1919
        %1953 = vst.msk [vmem:[#allocation2 + $0x3c] sm:$0xf] %vm1937, %v1920
        %1954 = vst.msk [vmem:[#allocation2 + $0x40] sm:$0xf] %vm1937, %v1921
        %1955 = vst.msk [vmem:[#allocation2 + $0x44] sm:$0xf] %vm1937, %v1922
        %1956 = vst.msk [vmem:[#allocation2 + $0x48] sm:$0xf] %vm1937, %v1923
        %1957 = vst.msk [vmem:[#allocation2 + $0x4c] sm:$0xf] %vm1937, %v1924
        %1958 = vst.msk [vmem:[#allocation2 + $0x50] sm:$0xf] %vm1937, %v1925
        %1959 = vst.msk [vmem:[#allocation2 + $0x54] sm:$0xf] %vm1937, %v1926
        %1960 = vst.msk [vmem:[#allocation2 + $0x58] sm:$0xf] %vm1937, %v1927
        %1961 = vst.msk [vmem:[#allocation2 + $0x5c] sm:$0xf] %vm1937, %v1928
        %1962 = vst.msk [vmem:[#allocation2 + $0x60] sm:$0xf] %vm1937, %v1929
        %1963 = vst.msk [vmem:[#allocation2 + $0x64] sm:$0xf] %vm1937, %v1930
        %1964 = vst.msk [vmem:[#allocation2 + $0x68] sm:$0xf] %vm1937, %v1931
        %1965 = vst.msk [vmem:[#allocation2 + $0x6c] sm:$0xf] %vm1937, %v1932
        %1966 = vst.msk [vmem:[#allocation2 + $0x70] sm:$0xf] %vm1937, %v1933
        %1967 = vst.msk [vmem:[#allocation2 + $0x74] sm:$0xf] %vm1937, %v1934
        %1968 = vst.msk [vmem:[#allocation2 + $0x78] sm:$0xf] %vm1937, %v1935
        %1969 = vst.msk [vmem:[#allocation2 + $0x7c] sm:$0xf] %vm1937, %v1936
      $region36: #{separable_conv2d.1} parent=31 // pred_fallthru
        _
      %v1970 = vld [vmem:[#allocation2] sm:$0xf]
      %v1971 = vld [vmem:[#allocation2 + $0x4] sm:$0xf]
      %v1972 = vld [vmem:[#allocation2 + $0x8] sm:$0xf]
      %v1973 = vld [vmem:[#allocation2 + $0xc] sm:$0xf]
      %v1974 = vld [vmem:[#allocation2 + $0x10] sm:$0xf]
      %v1975 = vld [vmem:[#allocation2 + $0x14] sm:$0xf]
      %v1976 = vld [vmem:[#allocation2 + $0x18] sm:$0xf]
      %v1977 = vld [vmem:[#allocation2 + $0x1c] sm:$0xf]
      %v1978 = vld [vmem:[#allocation2 + $0x20] sm:$0xf]
      %v1979 = vld [vmem:[#allocation2 + $0x24] sm:$0xf]
      %v1980 = vld [vmem:[#allocation2 + $0x28] sm:$0xf]
      %v1981 = vld [vmem:[#allocation2 + $0x2c] sm:$0xf]
      %v1982 = vld [vmem:[#allocation2 + $0x30] sm:$0xf]
      %v1983 = vld [vmem:[#allocation2 + $0x34] sm:$0xf]
      %v1984 = vld [vmem:[#allocation2 + $0x38] sm:$0xf]
      %v1985 = vld [vmem:[#allocation2 + $0x3c] sm:$0xf]
      %v1986 = vld [vmem:[#allocation2 + $0x40] sm:$0xf]
      %v1987 = vld [vmem:[#allocation2 + $0x44] sm:$0xf]
      %v1988 = vld [vmem:[#allocation2 + $0x48] sm:$0xf]
      %v1989 = vld [vmem:[#allocation2 + $0x4c] sm:$0xf]
      %v1990 = vld [vmem:[#allocation2 + $0x50] sm:$0xf]
      %v1991 = vld [vmem:[#allocation2 + $0x54] sm:$0xf]
      %v1992 = vld [vmem:[#allocation2 + $0x58] sm:$0xf]
      %v1993 = vld [vmem:[#allocation2 + $0x5c] sm:$0xf]
      %v1994 = vld [vmem:[#allocation2 + $0x60] sm:$0xf]
      %v1995 = vld [vmem:[#allocation2 + $0x64] sm:$0xf]
      %v1996 = vld [vmem:[#allocation2 + $0x68] sm:$0xf]
      %v1997 = vld [vmem:[#allocation2 + $0x6c] sm:$0xf]
      %v1998 = vld [vmem:[#allocation2 + $0x70] sm:$0xf]
      %v1999 = vld [vmem:[#allocation2 + $0x74] sm:$0xf]
      %v2000 = vld [vmem:[#allocation2 + $0x78] sm:$0xf]
      %v2001 = vld [vmem:[#allocation2 + $0x7c] sm:$0xf]
      %v2002 = vld [vmem:[%s199] sm:$0xf]
      %v2003 = vld [vmem:[%s199 + $0x4] sm:$0xf]
      %v2004 = vld [vmem:[%s199 + $0x8] sm:$0xf]
      %v2005 = vld [vmem:[%s199 + $0xc] sm:$0xf]
      %v2038 = vunpack.c.l.b16 %v1970
      %v2039 = vunpack.c.l.b16 %v1971
      %v2040 = vunpack.c.l.b16 %v1972
      %v2041 = vunpack.c.l.b16 %v1973
      %v2042 = vunpack.c.l.b16 %v1974
      %v2043 = vunpack.c.l.b16 %v1975
      %v2044 = vunpack.c.l.b16 %v1976
      %v2045 = vunpack.c.l.b16 %v1977
      %v2046 = vunpack.c.l.b16 %v1978
      %v2047 = vunpack.c.l.b16 %v1979
      %v2048 = vunpack.c.l.b16 %v1980
      %v2049 = vunpack.c.l.b16 %v1981
      %v2050 = vunpack.c.l.b16 %v1982
      %v2051 = vunpack.c.l.b16 %v1983
      %v2052 = vunpack.c.l.b16 %v1984
      %v2053 = vunpack.c.l.b16 %v1985
      %v2054 = vunpack.c.l.b16 %v1986
      %v2055 = vunpack.c.l.b16 %v1987
      %v2056 = vunpack.c.l.b16 %v1988
      %v2057 = vunpack.c.l.b16 %v1989
      %v2058 = vunpack.c.l.b16 %v1990
      %v2059 = vunpack.c.l.b16 %v1991
      %v2060 = vunpack.c.l.b16 %v1992
      %v2061 = vunpack.c.l.b16 %v1993
      %v2062 = vunpack.c.l.b16 %v1994
      %v2063 = vunpack.c.l.b16 %v1995
      %v2064 = vunpack.c.l.b16 %v1996
      %v2065 = vunpack.c.l.b16 %v1997
      %v2066 = vunpack.c.l.b16 %v1998
      %v2067 = vunpack.c.l.b16 %v1999
      %v2068 = vunpack.c.l.b16 %v2000
      %v2069 = vunpack.c.l.b16 %v2001
      %v2070 = vpack.c.b16 %v2039, %v2038
      %v2071 = vpack.c.b16 %v2041, %v2040
      %v2072 = vpack.c.b16 %v2043, %v2042
      %v2073 = vpack.c.b16 %v2045, %v2044
      %v2074 = vpack.c.b16 %v2047, %v2046
      %v2075 = vpack.c.b16 %v2049, %v2048
      %v2076 = vpack.c.b16 %v2051, %v2050
      %v2077 = vpack.c.b16 %v2053, %v2052
      %v2078 = vpack.c.b16 %v2055, %v2054
      %v2079 = vpack.c.b16 %v2057, %v2056
      %v2080 = vpack.c.b16 %v2059, %v2058
      %v2081 = vpack.c.b16 %v2061, %v2060
      %v2082 = vpack.c.b16 %v2063, %v2062
      %v2083 = vpack.c.b16 %v2065, %v2064
      %v2084 = vpack.c.b16 %v2067, %v2066
      %v2085 = vpack.c.b16 %v2069, %v2068
      %v2090 = vunpack.c.l.b16 %v2002
      %v2091 = vunpack.c.l.b16 %v2003
      %v2092 = vunpack.c.l.b16 %v2004
      %v2093 = vunpack.c.l.b16 %v2005
      %v2094 = vpack.c.b16 %v2091, %v2090
      %v2095 = vpack.c.b16 %v2093, %v2092
      %vm2098 = vcmask 261120
      %v2100 = vsel %vm2098, %v2070, 0
      %v2103 = vsel %vm2098, %v2071, 0
      %v2106 = vsel %vm2098, %v2072, 0
      %v2109 = vsel %vm2098, %v2073, 0
      %v2112 = vsel %vm2098, %v2074, 0
      %v2115 = vsel %vm2098, %v2075, 0
      %v2118 = vsel %vm2098, %v2076, 0
      %v2121 = vsel %vm2098, %v2077, 0
      %v2124 = vsel %vm2098, %v2078, 0
      %v2127 = vsel %vm2098, %v2079, 0
      %v2130 = vsel %vm2098, %v2080, 0
      %v2133 = vsel %vm2098, %v2081, 0
      %v2136 = vsel %vm2098, %v2082, 0
      %v2139 = vsel %vm2098, %v2083, 0
      %v2142 = vsel %vm2098, %v2084, 0
      %v2145 = vsel %vm2098, %v2085, 0
      %2147 = vmatpush.bf16.msra.mxu0 0
      %2148 = vmatpush.bf16.msra.mxu0 0
      %2149 = vmatpush.bf16.msra.mxu0 0
      %2150 = vmatpush.bf16.msra.mxu0 0
      %2151 = vmatpush.bf16.msra.mxu0 0
      %2152 = vmatpush.bf16.msra.mxu0 0
      %2153 = vmatpush.bf16.msra.mxu0 %v2095
      %2154 = vmatpush.bf16.msra.mxu0 %v2094
      %2155 = vmatmul.bf16.gmra.mxu0 %v2100
      %v2156 = vpop.f32.mrf.mxu0
      %v2157 = vadd.f32 0.0, %v2156
      %v2158 = vpop.f32.mrf.mxu0
      %v2159 = vadd.f32 0.0, %v2158
      %2160 = vmatmul.bf16.gmra.mxu0 %v2103
      %v2161 = vpop.f32.mrf.mxu0
      %v2162 = vadd.f32 0.0, %v2161
      %v2163 = vpop.f32.mrf.mxu0
      %v2164 = vadd.f32 0.0, %v2163
      %2165 = vmatmul.bf16.gmra.mxu0 %v2106
      %v2166 = vpop.f32.mrf.mxu0
      %v2167 = vadd.f32 0.0, %v2166
      %v2168 = vpop.f32.mrf.mxu0
      %v2169 = vadd.f32 0.0, %v2168
      %2170 = vmatmul.bf16.gmra.mxu0 %v2109
      %v2171 = vpop.f32.mrf.mxu0
      %v2172 = vadd.f32 0.0, %v2171
      %v2173 = vpop.f32.mrf.mxu0
      %v2174 = vadd.f32 0.0, %v2173
      %2175 = vmatmul.bf16.gmra.mxu0 %v2112
      %v2176 = vpop.f32.mrf.mxu0
      %v2177 = vadd.f32 0.0, %v2176
      %v2178 = vpop.f32.mrf.mxu0
      %v2179 = vadd.f32 0.0, %v2178
      %2180 = vmatmul.bf16.gmra.mxu0 %v2115
      %v2181 = vpop.f32.mrf.mxu0
      %v2182 = vadd.f32 0.0, %v2181
      %v2183 = vpop.f32.mrf.mxu0
      %v2184 = vadd.f32 0.0, %v2183
      %2185 = vmatmul.bf16.gmra.mxu0 %v2118
      %v2186 = vpop.f32.mrf.mxu0
      %v2187 = vadd.f32 0.0, %v2186
      %v2188 = vpop.f32.mrf.mxu0
      %v2189 = vadd.f32 0.0, %v2188
      %2190 = vmatmul.bf16.gmra.mxu0 %v2121
      %v2191 = vpop.f32.mrf.mxu0
      %v2192 = vadd.f32 0.0, %v2191
      %v2193 = vpop.f32.mrf.mxu0
      %v2194 = vadd.f32 0.0, %v2193
      %2195 = vmatmul.bf16.gmra.mxu0 %v2124
      %v2196 = vpop.f32.mrf.mxu0
      %v2197 = vadd.f32 0.0, %v2196
      %v2198 = vpop.f32.mrf.mxu0
      %v2199 = vadd.f32 0.0, %v2198
      %2200 = vmatmul.bf16.gmra.mxu0 %v2127
      %v2201 = vpop.f32.mrf.mxu0
      %v2202 = vadd.f32 0.0, %v2201
      %v2203 = vpop.f32.mrf.mxu0
      %v2204 = vadd.f32 0.0, %v2203
      %2205 = vmatmul.bf16.gmra.mxu0 %v2130
      %v2206 = vpop.f32.mrf.mxu0
      %v2207 = vadd.f32 0.0, %v2206
      %v2208 = vpop.f32.mrf.mxu0
      %v2209 = vadd.f32 0.0, %v2208
      %2210 = vmatmul.bf16.gmra.mxu0 %v2133
      %v2211 = vpop.f32.mrf.mxu0
      %v2212 = vadd.f32 0.0, %v2211
      %v2213 = vpop.f32.mrf.mxu0
      %v2214 = vadd.f32 0.0, %v2213
      %2215 = vmatmul.bf16.gmra.mxu0 %v2136
      %v2216 = vpop.f32.mrf.mxu0
      %v2217 = vadd.f32 0.0, %v2216
      %v2218 = vpop.f32.mrf.mxu0
      %v2219 = vadd.f32 0.0, %v2218
      %2220 = vmatmul.bf16.gmra.mxu0 %v2139
      %v2221 = vpop.f32.mrf.mxu0
      %v2222 = vadd.f32 0.0, %v2221
      %v2223 = vpop.f32.mrf.mxu0
      %v2224 = vadd.f32 0.0, %v2223
      %2225 = vmatmul.bf16.gmra.mxu0 %v2142
      %v2226 = vpop.f32.mrf.mxu0
      %v2227 = vadd.f32 0.0, %v2226
      %v2228 = vpop.f32.mrf.mxu0
      %v2229 = vadd.f32 0.0, %v2228
      %2230 = vmatmul.bf16.gmra.mxu0 %v2145
      %v2231 = vpop.f32.mrf.mxu0
      %v2232 = vadd.f32 0.0, %v2231
      %v2233 = vpop.f32.mrf.mxu0
      %v2234 = vadd.f32 0.0, %v2233
      %2235 = vdwg.mxu0
      %2236 = vst [vmem:[%s207] sm:$0xff] %v2157
      %2237 = vst [vmem:[%s207 + $0x8] sm:$0xff] %v2159
      %2238 = vst [vmem:[%s207 + $0x10] sm:$0xff] %v2162
      %2239 = vst [vmem:[%s207 + $0x18] sm:$0xff] %v2164
      %2240 = vst [vmem:[%s207 + $0x20] sm:$0xff] %v2167
      %2241 = vst [vmem:[%s207 + $0x28] sm:$0xff] %v2169
      %2242 = vst [vmem:[%s207 + $0x30] sm:$0xff] %v2172
      %2243 = vst [vmem:[%s207 + $0x38] sm:$0xff] %v2174
      %2244 = vst [vmem:[%s207 + $0x40] sm:$0xff] %v2177
      %2245 = vst [vmem:[%s207 + $0x48] sm:$0xff] %v2179
      %2246 = vst [vmem:[%s207 + $0x50] sm:$0xff] %v2182
      %2247 = vst [vmem:[%s207 + $0x58] sm:$0xff] %v2184
      %2248 = vst [vmem:[%s207 + $0x60] sm:$0xff] %v2187
      %2249 = vst [vmem:[%s207 + $0x68] sm:$0xff] %v2189
      %2250 = vst [vmem:[%s207 + $0x70] sm:$0xff] %v2192
      %2251 = vst [vmem:[%s207 + $0x78] sm:$0xff] %v2194
      %2252 = vst [vmem:[%s207 + $0x80] sm:$0xff] %v2197
      %2253 = vst [vmem:[%s207 + $0x88] sm:$0xff] %v2199
      %2254 = vst [vmem:[%s207 + $0x90] sm:$0xff] %v2202
      %2255 = vst [vmem:[%s207 + $0x98] sm:$0xff] %v2204
      %2256 = vst [vmem:[%s207 + $0xa0] sm:$0xff] %v2207
      %2257 = vst [vmem:[%s207 + $0xa8] sm:$0xff] %v2209
      %2258 = vst [vmem:[%s207 + $0xb0] sm:$0xff] %v2212
      %2259 = vst [vmem:[%s207 + $0xb8] sm:$0xff] %v2214
      %2260 = vst [vmem:[%s207 + $0xc0] sm:$0xff] %v2217
      %2261 = vst [vmem:[%s207 + $0xc8] sm:$0xff] %v2219
      %2262 = vst [vmem:[%s207 + $0xd0] sm:$0xff] %v2222
      %2263 = vst [vmem:[%s207 + $0xd8] sm:$0xff] %v2224
      %2264 = vst [vmem:[%s207 + $0xe0] sm:$0xff] %v2227
      %2265 = vst [vmem:[%s207 + $0xe8] sm:$0xff] %v2229
      %2266 = vst [vmem:[%s207 + $0xf0] sm:$0xff] %v2232
      %2267 = vst [vmem:[%s207 + $0xf8] sm:$0xff] %v2234
      %p2268 = scmp.lt.s32.totalorder %s18, 1
      %s2269 = scalar_select %p2268, %s18, 1
      %p2270 = scmp.lt.s32.totalorder %s19, 0
      %s2271 = scalar_select %p2270, %s19, 0
      %s2272 = smul.addr %s2269, 32
      %s2273 = sadd.s32 %s2271, %s2272
      %s2274 = smul.addr %s2273, 8
      %s2275 = scalar_lea.vmem %s3, %s2274
      // Predicated region
      $region37: #{separable_conv2d.1} parent=31 // pred_check
        %p2276 = pneg %p119
      $region38: #{separable_conv2d.1} parent=31 // pred_check_branch
        %2278 = sbr.rel (%p2276) target = $region40
      $region39: #{separable_conv2d.1} parent=31 // pred_region
        _
      $region40: #{separable_conv2d.1} parent=31 // pred_fallthru
        _
    $region32: #{separable_conv2d.1} parent=5 // pred_fallthru
      _
    %p2279 = scmp.le.s32.totalorder 2, %s9
    // Predicated region
    $region41: #{separable_conv2d.1} parent=5 // pred_check
      %p2280 = pneg %p2279
    $region42: #{separable_conv2d.1} parent=5 // pred_check_branch
      %2282 = sbr.rel (%p2280) target = $region44
    $region43: #{separable_conv2d.1} parent=5 // pred_region
      %s2283 = ssub.s32 %s9, 2
      // Predicated region
      $region45: #{separable_conv2d.1} parent=43 // pred_check
        %p2284 = pneg %p125
      $region46: #{separable_conv2d.1} parent=43 // pred_check_branch
        %2286 = sbr.rel (%p2284) target = $region48
      $region47: #{separable_conv2d.1} parent=43 // pred_region
        %p2287 = scmp.lt.s32.totalorder %s20, 1
        %s2288 = scalar_select %p2287, %s20, 1
        %p2289 = scmp.lt.s32.totalorder %s21, 0
        %s2290 = scalar_select %p2289, %s21, 0
        %s2291 = smul.addr %s2288, 32
        %s2292 = sadd.s32 %s2290, %s2291
        %s2293 = smul.addr %s2292, 8
        %s2294 = scalar_lea.vmem %s3, %s2293
      $region48: #{separable_conv2d.1} parent=43 // pred_fallthru
        _
    $region44: #{separable_conv2d.1} parent=5 // pred_fallthru
      _
  $region6: #{separable_conv2d.1} parent=0 // loop_footer
    %s13 = sadd.s32 1, %s9
  $region7: #{separable_conv2d.1} parent=0 // loop_footer_branch
    %8 = sbr.rel target = $region3
  $region8: #{separable_conv2d.1} parent=0 // loop_exit
    _

</llo_original>
